<compile_context>
chip_gen: v5e
topology: v5e:2x2
jax: 0.10.0
libtpu: 0.0.40
codegen_flags: <defaults>
</compile_context>

<pallas_src>
import functools

import jax
import jax.numpy as jnp
from jax.experimental import pallas as pl
from jax.experimental.pallas import tpu as pltpu

CAT_LEN = 12        # len(categories)
NUM_CLASSES = 20    # cardinality of every categorical feature
EMB_DIM = 4         # embedding_dim
NUM_CONT = 67       # num_continuous
NUM_CHANNELS = CAT_LEN + NUM_CONT   # 79
H = W = 7           # spatial size implied by F.pad(...,(1,0,0,1)) -> 8x8 swin input

# Packed-bias layout (row offsets into the single (504,1) bias array).
_BIAS_SLICES = {}
_off = 0
for _name, _size in (("b1", 256), ("b2", 128), ("b3", 32), ("b4", 8),
                     ("b5a", 32), ("bfb", 32), ("bfc", 16)):
    _BIAS_SLICES[_name] = (_off, _off + _size)
    _off += _size
BIAS_TOTAL = _off   # 504 (all offsets are multiples of 8 -> aligned sublane slices)


def _round_up(x, m):
    return ((x + m - 1) // m) * m


def _cdiv(a, b):
    return -(-a // b)


def _elementwise_dtype():
    """bf16 VALU exists on v6e/v7x; keep element-wise math f32 on v5e and older."""
    try:
        kind = jax.devices()[0].device_kind.lower()
    except Exception:
        return jnp.float32
    if any(tag in kind for tag in ("v6", "v7", "tpu7", "7x")):
        return jnp.bfloat16
    return jnp.float32


# ----------------------------- Pallas kernel ------------------------------
# Feature-major: activations are (features, TN) so TN (>=128) sits on lanes.

def _tab_mlp_kernel(categ_ref, cont_ref, rep_ref, clsmod_ref,
                    w1c_ref, w1e_ref, w2_ref, w3_ref, w4_ref,
                    w5a_ref, wfb_ref, wfc_ref, bias_ref, out_ref,
                    *, compute_dtype):
    f32 = jnp.float32
    cdt = compute_dtype

    def dotw(w_ref, x):
        w = w_ref[...]                                   # (out, in), bf16
        return jnp.dot(w, x.astype(w.dtype), preferred_element_type=f32)

    def bias(name):
        lo, hi = _BIAS_SLICES[name]
        return bias_ref[lo:hi, :].astype(cdt)            # (F, 1), static slice

    def act(y, name):
        # bias-add + ReLU in the per-generation element-wise dtype.
        return jnp.maximum(y.astype(cdt) + bias(name), 0)

    cats = categ_ref[...]                                # (12,  TN) bf16, exact ints
    cont = cont_ref[...]                                 # (67,  TN) bf16

    # Embedding lookup as one fused one-hot matmul:
    #  rep (240,12) gathers each row's category value into its 20-wide class
    #  block; comparing against clsmod (class id within the block) yields the
    #  (240, TN) one-hot in a single vcmp, built directly in bf16.  Values
    #  outside [0,20) give a zero embedding.  Zero-padded pixel columns hit
    #  class 0 and produce garbage that the wrapper drops via out[:, :n].
    cats_rep = dotw(rep_ref, cats)                       # (240, TN) f32, exact ints
    onehot = (cats_rep == clsmod_ref[...]).astype(jnp.bfloat16)

    # fc1 on cat([cont, emb_0..emb_11]) == w1c @ cont + (emb@w1_rows) @ onehot
    h = act(dotw(w1c_ref, cont) + dotw(w1e_ref, onehot), "b1")   # relu(fc1)
    h = act(dotw(w2_ref, h), "b2")                               # relu(fc2)
    h = act(dotw(w3_ref, h), "b3")                               # relu(fc3)
    h = act(dotw(w4_ref, h), "b4")                               # relu(fc4)
    # fc5 composed with fc[0] at trace time (no nonlinearity in between).
    g = act(dotw(w5a_ref, h), "b5a")                             # relu(fc[0]∘fc5)
    g = act(dotw(wfb_ref, g), "bfb")                             # relu(fc[2])
    lo, hi = _BIAS_SLICES["bfc"]
    out_ref[...] = dotw(wfc_ref, g) + bias_ref[lo:hi, :]         # fc[4] -> (16, TN) f32


def _tab_pixel_features(categ_T, cont_T, kp):
    """Fused per-pixel tab MLP.  categ_T (12,n) bf16, cont_T (67,n) bf16
    -> (16, n) f32, lane-dense feature-major output."""
    n = categ_T.shape[1]
    n_min = _round_up(max(n, 1), 128)
    # Tile cap 1024: fits comfortably under v7x's 64 MiB VMEM while amortizing
    # the per-step overhead / per-layer MXU drain on v5e/v6e.  When the pixel
    # axis spans more than one 128-lane tile, aim for >=2 grid steps so the
    # "parallel" axis can split across both v7x TensorCores (harmless on
    # single-TC chips: ~0.35us extra per step).
    tn = min(1024, max(128, _round_up(_cdiv(n_min, 2), 128)))
    n_pad = _round_up(n, tn)
    categ_p = jnp.pad(categ_T, ((0, 0), (0, n_pad - n)))
    cont_p = jnp.pad(cont_T, ((0, 0), (0, n_pad - n)))

    wnames = ("rep", "clsmod", "w1c", "w1e", "w2", "w3", "w4",
              "w5a", "wfb", "wfc", "bias")
    weights = [kp[k] for k in wnames]

    kernel = functools.partial(_tab_mlp_kernel, compute_dtype=kp["compute_dtype"])
    out = pl.pallas_call(
        kernel,
        out_shape=jax.ShapeDtypeStruct((16, n_pad), jnp.float32),
        grid=(n_pad // tn,),
        in_specs=[pl.BlockSpec((CAT_LEN, tn), lambda i: (0, i)),
                  pl.BlockSpec((NUM_CONT, tn), lambda i: (0, i))]
                 # Constant index_map: weight blocks never change across grid
                 # steps, so the pipeline keeps them resident (no re-DMA).
                 + [pl.BlockSpec(w.shape, lambda i: (0, 0)) for w in weights],
        out_specs=pl.BlockSpec((16, tn), lambda i: (0, i)),
        compiler_params=pltpu.CompilerParams(
            dimension_semantics=("parallel",),
            vmem_limit_bytes=48 * 1024 * 1024),   # ~25% headroom on v7x's 64 MiB
    )(categ_p, cont_p, *weights)
    return out[:, :n]


# ------------------------------ parameters --------------------------------

def init_params(key):
    """PyTorch-like parameters (weights as (in, out), biases as (1, out))."""
    ks = jax.random.split(key, 11)

    def lin(k, fi, fo):
        kw, kb = jax.random.split(k)
        w = jax.random.normal(kw, (fi, fo), jnp.float32) * (1.0 / float(fi) ** 0.5)
        b = jax.random.normal(kb, (1, fo), jnp.float32) * 0.01
        return w, b

    emb = jax.random.normal(ks[0], (CAT_LEN, NUM_CLASSES, EMB_DIM), jnp.float32)
    in1 = NUM_CONT + CAT_LEN * EMB_DIM          # 67 + 48 = 115
    w1, b1 = lin(ks[1], in1, 256)
    w2, b2 = lin(ks[2], 256, 128)
    w3, b3 = lin(ks[3], 128, 32)
    w4, b4 = lin(ks[4], 32, 8)
    w5, b5 = lin(ks[5], 8, 2)
    wfa, bfa = lin(ks[6], 16, 32)               # fc Sequential
    wfb, bfb = lin(ks[7], 32, 32)
    wfc, bfc = lin(ks[8], 32, 16)
    wh, bh = lin(ks[9], 32, 8)                  # fc_hidden
    wf, bf = lin(ks[10], 8, 2)                  # fc_final
    return dict(emb=emb, w1=w1, b1=b1, w2=w2, b2=b2, w3=w3, b3=b3, w4=w4,
                b4=b4, w5=w5, b5=b5, wfa=wfa, bfa=bfa, wfb=wfb, bfb=bfb,
                wfc=wfc, bfc=bfc, wh=wh, bh=bh, wf=wf, bf=bf)


def prepare_params(p, dot_dtype=jnp.bfloat16, compute_dtype=None):
    """Trace-time fusion + layout prep for the kernel.
    Weights for MXU dots are stored (out,in) in `dot_dtype`; biases are packed
    into one (504,1) f32 array; element-wise dtype is chosen per generation."""
    f32 = jnp.float32
    if compute_dtype is None:
        compute_dtype = _elementwise_dtype()
    cdt_w = lambda w: w.astype(dot_dtype)
    col = lambda b: b.reshape(-1, 1).astype(f32)        # (1,F) -> (F,1)

    # One-hot helpers: rep[j,i] = 1 iff class-block of row j is category i;
    # clsmod[j] = within-block class id (j % 20).  Values 0..19 are exact bf16.
    j = jnp.arange(CAT_LEN * NUM_CLASSES)
    rep = (j[:, None] // NUM_CLASSES == jnp.arange(CAT_LEN)[None, :]).astype(f32)
    clsmod = (j % NUM_CLASSES).astype(f32).reshape(-1, 1)

    # Fold each embedding table into the matching fc1 rows:
    #   emb_i(lookup) @ w1_rows_i  ==  onehot_i @ (emb_i @ w1_rows_i)
    w1 = p["w1"]                                        # (115, 256)
    w1c = w1[:NUM_CONT]                                 # (67, 256)
    w1_rows = w1[NUM_CONT:].reshape(CAT_LEN, EMB_DIM, 256)
    w1e = jnp.einsum("kce,ked->kcd", p["emb"], w1_rows).reshape(
        CAT_LEN * NUM_CLASSES, 256)                     # (240, 256)

    # fc5 has no nonlinearity before fc[0] -> compose at trace time.
    # TODO(synk): the PyTorch source feeds fc5's 2-d output into nn.Linear(16,32)
    # (dimension mismatch in the original); bridged by zero-padding 2->16, i.e.
    # only rows 0:2 of that (16,32) weight participate.
    w5a = p["w5"] @ p["wfa"][0:2, :]                    # (8, 32)
    b5a = p["b5"] @ p["wfa"][0:2, :] + p["bfa"]         # (1, 32)

    bias_all = jnp.concatenate(
        [col(p["b1"]), col(p["b2"]), col(p["b3"]), col(p["b4"]),
         col(b5a), col(p["bfb"]), col(p["bfc"])], axis=0)   # (504, 1) f32
    assert bias_all.shape[0] == BIAS_TOTAL

    return dict(
        compute_dtype=compute_dtype,
        rep=cdt_w(rep), clsmod=clsmod.astype(dot_dtype),
        w1c=cdt_w(w1c.T), w1e=cdt_w(w1e.T),
        w2=cdt_w(p["w2"].T), w3=cdt_w(p["w3"].T), w4=cdt_w(p["w4"].T),
        w5a=cdt_w(w5a.T), wfb=cdt_w(p["wfb"].T), wfc=cdt_w(p["wfc"].T),
        bias=bias_all,
        # tiny head stays in plain XLA, f32
        wh=p["wh"].astype(f32), bh=p["bh"].astype(f32),
        wf=p["wf"].astype(f32), bf=p["bf"].astype(f32),
    )


# --------------------- plain-XLA tab MLP (same math) ----------------------

def _tab_features_jnp(categ_T, cont_T, kp):
    """Plain-XLA equivalent of the Pallas kernel (feature-major), used for the
    tiny-batch fast path and as the in-script reference.  categ_T (12,n),
    cont_T (67,n) -> (16,n) f32."""
    f32 = jnp.float32
    cdt = kp["compute_dtype"]
    n = categ_T.shape[1]
    oh = (categ_T.astype(jnp.int32)[:, None, :] ==
          jnp.arange(NUM_CLASSES)[None, :, None])               # (12, 20, n)
    onehot_T = oh.reshape(CAT_LEN * NUM_CLASSES, n).astype(jnp.bfloat16)

    def dotw(w, x):
        return jnp.dot(w, x.astype(w.dtype), preferred_element_type=f32)

    def act(y, name):
        lo, hi = _BIAS_SLICES[name]
        return jnp.maximum(y.astype(cdt) + kp["bias"][lo:hi].astype(cdt), 0)

    h = act(dotw(kp["w1c"], cont_T) + dotw(kp["w1e"], onehot_T), "b1")
    h = act(dotw(kp["w2"], h), "b2")
    h = act(dotw(kp["w3"], h), "b3")
    h = act(dotw(kp["w4"], h), "b4")
    g = act(dotw(kp["w5a"], h), "b5a")
    g = act(dotw(kp["wfb"], g), "bfb")
    lo, hi = _BIAS_SLICES["bfc"]
    return dotw(kp["wfc"], g) + kp["bias"][lo:hi]                # (16, n) f32


def _head(tab_center, kp):
    """concat(tab_center, swin) -> fc_hidden -> relu -> fc_final (plain XLA)."""
    f32 = jnp.float32
    B = tab_center.shape[0]
    # TODO(synk): sw.SwinTransformerV2 is not provided; its 16-d output is
    # stubbed with zeros.
    swin_features = jnp.zeros((B, 16), f32)
    feat = jnp.concatenate([tab_center.astype(f32), swin_features], axis=1)  # (B,32)
    hh = jnp.maximum(feat @ kp["wh"] + kp["bh"], 0.0)
    return hh @ kp["wf"] + kp["bf"]                              # (B, 2)


# ------------------------------- forward ----------------------------------

def mlp_rp_tab_forward(img, kp, compute_swin_input=True):
    B, C, Hh, Ww = img.shape
    bf16 = jnp.bfloat16

    if compute_swin_input:
        # Full per-pixel map (faithful to the PyTorch forward, which feeds the
        # per-pixel tab features to swin).  Pixel columns in (b, h, w) order,
        # feature-major for the kernel; inputs cast to bf16 in the wrapper
        # (exact for categ values 0..19; identical to the in-kernel bf16 cast
        # the dots would do anyway for cont).
        pix_T = img.reshape(B, C, Hh * Ww).transpose(1, 0, 2).reshape(C, B * Hh * Ww)
        categ_T = pix_T[:CAT_LEN].astype(jnp.int32).astype(bf16)   # torch .long()
        cont_T = pix_T[CAT_LEN:].astype(bf16)
        tab16 = _tab_pixel_features(categ_T, cont_T, kp)            # (16, B*H*W)
        output_tensor = tab16.reshape(16, B, Hh, Ww).transpose(1, 0, 2, 3)  # NCHW
        kk = jnp.pad(output_tensor, ((0, 0), (0, 0), (0, 1), (1, 0)))       # (B,16,8,8)
        # TODO(synk): swin branch stubbed; kk is only built for shape fidelity.
        del kk
        tab_center = output_tensor[:, :, 3, 3]                              # (B, 16)
    else:
        # Swin branch is stubbed to zeros, so only the (3,3) centre pixel of
        # each image reaches the head -> skip the 48/49 dead per-pixel rows.
        pix_T = img[:, :, 3, 3].T                                   # (C, B)
        categ_i = pix_T[:CAT_LEN].astype(jnp.int32)
        cont_T = pix_T[CAT_LEN:].astype(bf16)
        if B >= 512:
            tab_center = _tab_pixel_features(categ_i.astype(bf16), cont_T, kp).T
        else:
            # Tiny batch: a 128-lane Pallas tile would be >98% padding and the
            # launch + ~0.25 MiB weight DMA dominates -> plain XLA wins.
            tab_center = _tab_features_jnp(categ_i, cont_T, kp).T   # (B, 16)

    return _head(tab_center, kp)                                    # (B, 2)


# -------------------- plain-jnp reference (same math) ---------------------

def reference_forward(img, kp):
    pix_T = img[:, :, 3, 3].T                                       # (C, B)
    tab_center = _tab_features_jnp(pix_T[:CAT_LEN],
                                   pix_T[CAT_LEN:].astype(jnp.bfloat16), kp).T
    return _head(tab_center, kp)


if __name__ == "__main__":
    key = jax.random.PRNGKey(0)
    kparam, kc, kx = jax.random.split(key, 3)
    params = init_params(kparam)
    kp = prepare_params(params)

    B = 2
    cat_img = jax.random.randint(kc, (B, CAT_LEN, H, W), 0, NUM_CLASSES).astype(jnp.float32)
    cont_img = jax.random.normal(kx, (B, NUM_CONT, H, W), jnp.float32)
    img_data = jnp.concatenate([cat_img, cont_img], axis=1)   # (2, 79, 7, 7)

    # Full path (Pallas kernel over all B*7*7 pixel columns) and fast path
    # (centre pixel only; tiny B -> plain XLA).
    fwd_full = jax.jit(lambda x: mlp_rp_tab_forward(x, kp, compute_swin_input=True))
    fwd_fast = jax.jit(lambda x: mlp_rp_tab_forward(x, kp, compute_swin_input=False))

    out_full = jax.block_until_ready(fwd_full(img_data))
    out_fast = jax.block_until_ready(fwd_fast(img_data))
    ref = jax.block_until_ready(reference_forward(img_data, kp))

    # bf16 element-wise math (v6e/v7x) shifts numerics slightly vs f32.
    tol = 3e-2 if kp["compute_dtype"] == jnp.bfloat16 else 2e-3
    assert out_full.shape == (B, 2) and out_full.dtype == jnp.float32
    assert jnp.allclose(out_full, ref, atol=tol, rtol=tol)
    assert jnp.allclose(out_fast, ref, atol=tol, rtol=tol)
    print("KERNEL_OK")
</pallas_src>

<mosaic_0001>
module attributes {stable_mosaic.version = 11 : i64} {
  func.func @_tab_mlp_kernel(%arg0: i32, %arg1: memref<12x128xbf16, #tpu.memory_space<vmem>>, %arg2: memref<67x128xbf16, #tpu.memory_space<vmem>>, %arg3: memref<240x12xbf16, #tpu.memory_space<vmem>>, %arg4: memref<240x1xbf16, #tpu.memory_space<vmem>>, %arg5: memref<256x67xbf16, #tpu.memory_space<vmem>>, %arg6: memref<256x240xbf16, #tpu.memory_space<vmem>>, %arg7: memref<128x256xbf16, #tpu.memory_space<vmem>>, %arg8: memref<32x128xbf16, #tpu.memory_space<vmem>>, %arg9: memref<8x32xbf16, #tpu.memory_space<vmem>>, %arg10: memref<32x8xbf16, #tpu.memory_space<vmem>>, %arg11: memref<32x32xbf16, #tpu.memory_space<vmem>>, %arg12: memref<16x32xbf16, #tpu.memory_space<vmem>>, %arg13: memref<504x1xf32, #tpu.memory_space<vmem>>, %arg14: memref<16x128xf32, #tpu.memory_space<vmem>>) attributes {dimension_semantics = [#tpu.dimension_semantics<parallel>], iteration_bounds = array<i64: 1>, scalar_prefetch = 0 : i64, scratch_operands = 0 : i64, tpu.core_type = #tpu.core_type<tc>, window_params = [{transform_indices = @transform_0, window_bounds = array<i64: 12, 128>}, {transform_indices = @transform_1, window_bounds = array<i64: 67, 128>}, {pipeline_mode = #tpu.pipeline_mode<synchronous>, transform_indices = @transform_2, window_bounds = array<i64: 240, 12>}, {pipeline_mode = #tpu.pipeline_mode<synchronous>, transform_indices = @transform_3, window_bounds = array<i64: 240, 1>}, {pipeline_mode = #tpu.pipeline_mode<synchronous>, transform_indices = @transform_4, window_bounds = array<i64: 256, 67>}, {pipeline_mode = #tpu.pipeline_mode<synchronous>, transform_indices = @transform_5, window_bounds = array<i64: 256, 240>}, {pipeline_mode = #tpu.pipeline_mode<synchronous>, transform_indices = @transform_6, window_bounds = array<i64: 128, 256>}, {pipeline_mode = #tpu.pipeline_mode<synchronous>, transform_indices = @transform_7, window_bounds = array<i64: 32, 128>}, {pipeline_mode = #tpu.pipeline_mode<synchronous>, transform_indices = @transform_8, window_bounds = array<i64: 8, 32>}, {pipeline_mode = #tpu.pipeline_mode<synchronous>, transform_indices = @transform_9, window_bounds = array<i64: 32, 8>}, {pipeline_mode = #tpu.pipeline_mode<synchronous>, transform_indices = @transform_10, window_bounds = array<i64: 32, 32>}, {pipeline_mode = #tpu.pipeline_mode<synchronous>, transform_indices = @transform_11, window_bounds = array<i64: 16, 32>}, {pipeline_mode = #tpu.pipeline_mode<synchronous>, transform_indices = @transform_12, window_bounds = array<i64: 504, 1>}, {transform_indices = @transform_13, window_bounds = array<i64: 16, 128>}]} {
    %c0 = arith.constant 0 : index
    %c0_0 = arith.constant 0 : index
    %0 = vector.load %arg1[%c0, %c0_0] : memref<12x128xbf16, #tpu.memory_space<vmem>>, vector<12x128xbf16>
    %c0_1 = arith.constant 0 : index
    %c0_2 = arith.constant 0 : index
    %1 = vector.load %arg2[%c0_1, %c0_2] : memref<67x128xbf16, #tpu.memory_space<vmem>>, vector<67x128xbf16>
    %c0_3 = arith.constant 0 : index
    %c0_4 = arith.constant 0 : index
    %2 = vector.load %arg3[%c0_3, %c0_4] : memref<240x12xbf16, #tpu.memory_space<vmem>>, vector<240x12xbf16>
    %cst = arith.constant dense<0.000000e+00> : vector<240x128xf32>
    %3 = tpu.matmul %2, %0, %cst {dimension_numbers = #tpu.dot_dimension_numbers<[1], [0], [0], [1], [0, 0, 1, 1], [], []>} : vector<240x12xbf16>, vector<12x128xbf16>, vector<240x128xf32> -> vector<240x128xf32>
    %c0_5 = arith.constant 0 : index
    %c0_6 = arith.constant 0 : index
    %4 = vector.load %arg4[%c0_5, %c0_6] : memref<240x1xbf16, #tpu.memory_space<vmem>>, vector<240x1xbf16>
    %5 = arith.extf %4 : vector<240x1xbf16> to vector<240x1xf32>
    %6 = vector.broadcast %5 : vector<240x1xf32> to vector<240x128xf32>
    %7 = arith.cmpf oeq, %3, %6 : vector<240x128xf32>
    %8 = arith.extui %7 : vector<240x128xi1> to vector<240x128xi32>
    %9 = arith.sitofp %8 : vector<240x128xi32> to vector<240x128xf32>
    %10 = arith.truncf %9 : vector<240x128xf32> to vector<240x128xbf16>
    %c0_7 = arith.constant 0 : index
    %c0_8 = arith.constant 0 : index
    %11 = vector.load %arg5[%c0_7, %c0_8] : memref<256x67xbf16, #tpu.memory_space<vmem>>, vector<256x67xbf16>
    %cst_9 = arith.constant dense<0.000000e+00> : vector<256x128xf32>
    %12 = tpu.matmul %11, %1, %cst_9 {dimension_numbers = #tpu.dot_dimension_numbers<[1], [0], [0], [1], [0, 0, 1, 1], [], []>} : vector<256x67xbf16>, vector<67x128xbf16>, vector<256x128xf32> -> vector<256x128xf32>
    %c0_10 = arith.constant 0 : index
    %c0_11 = arith.constant 0 : index
    %13 = vector.load %arg6[%c0_10, %c0_11] : memref<256x240xbf16, #tpu.memory_space<vmem>>, vector<256x240xbf16>
    %cst_12 = arith.constant dense<0.000000e+00> : vector<256x128xf32>
    %14 = tpu.matmul %13, %10, %cst_12 {dimension_numbers = #tpu.dot_dimension_numbers<[1], [0], [0], [1], [0, 0, 1, 1], [], []>} : vector<256x240xbf16>, vector<240x128xbf16>, vector<256x128xf32> -> vector<256x128xf32>
    %15 = arith.addf %12, %14 : vector<256x128xf32>
    %c0_13 = arith.constant 0 : index
    %c0_14 = arith.constant 0 : index
    %16 = vector.load %arg13[%c0_13, %c0_14] : memref<504x1xf32, #tpu.memory_space<vmem>>, vector<256x1xf32>
    %17 = vector.broadcast %16 : vector<256x1xf32> to vector<256x128xf32>
    %18 = arith.addf %15, %17 : vector<256x128xf32>
    %cst_15 = arith.constant 0.000000e+00 : f32
    %19 = vector.broadcast %cst_15 : f32 to vector<256x128xf32>
    %20 = arith.maximumf %18, %19 : vector<256x128xf32>
    %c0_16 = arith.constant 0 : index
    %c0_17 = arith.constant 0 : index
    %21 = vector.load %arg7[%c0_16, %c0_17] : memref<128x256xbf16, #tpu.memory_space<vmem>>, vector<128x256xbf16>
    %22 = arith.truncf %20 : vector<256x128xf32> to vector<256x128xbf16>
    %cst_18 = arith.constant dense<0.000000e+00> : vector<128x128xf32>
    %23 = tpu.matmul %21, %22, %cst_18 {dimension_numbers = #tpu.dot_dimension_numbers<[1], [0], [0], [1], [0, 0, 1, 1], [], []>} : vector<128x256xbf16>, vector<256x128xbf16>, vector<128x128xf32> -> vector<128x128xf32>
    %c256 = arith.constant 256 : index
    %c0_19 = arith.constant 0 : index
    %24 = vector.load %arg13[%c256, %c0_19] : memref<504x1xf32, #tpu.memory_space<vmem>>, vector<128x1xf32>
    %25 = vector.broadcast %24 : vector<128x1xf32> to vector<128x128xf32>
    %26 = arith.addf %23, %25 : vector<128x128xf32>
    %cst_20 = arith.constant 0.000000e+00 : f32
    %27 = vector.broadcast %cst_20 : f32 to vector<128x128xf32>
    %28 = arith.maximumf %26, %27 : vector<128x128xf32>
    %c0_21 = arith.constant 0 : index
    %c0_22 = arith.constant 0 : index
    %29 = vector.load %arg8[%c0_21, %c0_22] : memref<32x128xbf16, #tpu.memory_space<vmem>>, vector<32x128xbf16>
    %30 = arith.truncf %28 : vector<128x128xf32> to vector<128x128xbf16>
    %cst_23 = arith.constant dense<0.000000e+00> : vector<32x128xf32>
    %31 = tpu.matmul %29, %30, %cst_23 {dimension_numbers = #tpu.dot_dimension_numbers<[1], [0], [0], [1], [0, 0, 1, 1], [], []>} : vector<32x128xbf16>, vector<128x128xbf16>, vector<32x128xf32> -> vector<32x128xf32>
    %c384 = arith.constant 384 : index
    %c0_24 = arith.constant 0 : index
    %32 = vector.load %arg13[%c384, %c0_24] : memref<504x1xf32, #tpu.memory_space<vmem>>, vector<32x1xf32>
    %33 = vector.broadcast %32 : vector<32x1xf32> to vector<32x128xf32>
    %34 = arith.addf %31, %33 : vector<32x128xf32>
    %cst_25 = arith.constant 0.000000e+00 : f32
    %35 = vector.broadcast %cst_25 : f32 to vector<32x128xf32>
    %36 = arith.maximumf %34, %35 : vector<32x128xf32>
    %c0_26 = arith.constant 0 : index
    %c0_27 = arith.constant 0 : index
    %37 = vector.load %arg9[%c0_26, %c0_27] : memref<8x32xbf16, #tpu.memory_space<vmem>>, vector<8x32xbf16>
    %38 = arith.truncf %36 : vector<32x128xf32> to vector<32x128xbf16>
    %cst_28 = arith.constant dense<0.000000e+00> : vector<8x128xf32>
    %39 = tpu.matmul %37, %38, %cst_28 {dimension_numbers = #tpu.dot_dimension_numbers<[1], [0], [0], [1], [0, 0, 1, 1], [], []>} : vector<8x32xbf16>, vector<32x128xbf16>, vector<8x128xf32> -> vector<8x128xf32>
    %c416 = arith.constant 416 : index
    %c0_29 = arith.constant 0 : index
    %40 = vector.load %arg13[%c416, %c0_29] : memref<504x1xf32, #tpu.memory_space<vmem>>, vector<8x1xf32>
    %41 = vector.broadcast %40 : vector<8x1xf32> to vector<8x128xf32>
    %42 = arith.addf %39, %41 : vector<8x128xf32>
    %cst_30 = arith.constant 0.000000e+00 : f32
    %43 = vector.broadcast %cst_30 : f32 to vector<8x128xf32>
    %44 = arith.maximumf %42, %43 : vector<8x128xf32>
    %c0_31 = arith.constant 0 : index
    %c0_32 = arith.constant 0 : index
    %45 = vector.load %arg10[%c0_31, %c0_32] : memref<32x8xbf16, #tpu.memory_space<vmem>>, vector<32x8xbf16>
    %46 = arith.truncf %44 : vector<8x128xf32> to vector<8x128xbf16>
    %cst_33 = arith.constant dense<0.000000e+00> : vector<32x128xf32>
    %47 = tpu.matmul %45, %46, %cst_33 {dimension_numbers = #tpu.dot_dimension_numbers<[1], [0], [0], [1], [0, 0, 1, 1], [], []>} : vector<32x8xbf16>, vector<8x128xbf16>, vector<32x128xf32> -> vector<32x128xf32>
    %c424 = arith.constant 424 : index
    %c0_34 = arith.constant 0 : index
    %48 = vector.load %arg13[%c424, %c0_34] : memref<504x1xf32, #tpu.memory_space<vmem>>, vector<32x1xf32>
    %49 = vector.broadcast %48 : vector<32x1xf32> to vector<32x128xf32>
    %50 = arith.addf %47, %49 : vector<32x128xf32>
    %cst_35 = arith.constant 0.000000e+00 : f32
    %51 = vector.broadcast %cst_35 : f32 to vector<32x128xf32>
    %52 = arith.maximumf %50, %51 : vector<32x128xf32>
    %c0_36 = arith.constant 0 : index
    %c0_37 = arith.constant 0 : index
    %53 = vector.load %arg11[%c0_36, %c0_37] : memref<32x32xbf16, #tpu.memory_space<vmem>>, vector<32x32xbf16>
    %54 = arith.truncf %52 : vector<32x128xf32> to vector<32x128xbf16>
    %cst_38 = arith.constant dense<0.000000e+00> : vector<32x128xf32>
    %55 = tpu.matmul %53, %54, %cst_38 {dimension_numbers = #tpu.dot_dimension_numbers<[1], [0], [0], [1], [0, 0, 1, 1], [], []>} : vector<32x32xbf16>, vector<32x128xbf16>, vector<32x128xf32> -> vector<32x128xf32>
    %c456 = arith.constant 456 : index
    %c0_39 = arith.constant 0 : index
    %56 = vector.load %arg13[%c456, %c0_39] : memref<504x1xf32, #tpu.memory_space<vmem>>, vector<32x1xf32>
    %57 = vector.broadcast %56 : vector<32x1xf32> to vector<32x128xf32>
    %58 = arith.addf %55, %57 : vector<32x128xf32>
    %cst_40 = arith.constant 0.000000e+00 : f32
    %59 = vector.broadcast %cst_40 : f32 to vector<32x128xf32>
    %60 = arith.maximumf %58, %59 : vector<32x128xf32>
    %c0_41 = arith.constant 0 : index
    %c0_42 = arith.constant 0 : index
    %61 = vector.load %arg12[%c0_41, %c0_42] : memref<16x32xbf16, #tpu.memory_space<vmem>>, vector<16x32xbf16>
    %62 = arith.truncf %60 : vector<32x128xf32> to vector<32x128xbf16>
    %cst_43 = arith.constant dense<0.000000e+00> : vector<16x128xf32>
    %63 = tpu.matmul %61, %62, %cst_43 {dimension_numbers = #tpu.dot_dimension_numbers<[1], [0], [0], [1], [0, 0, 1, 1], [], []>} : vector<16x32xbf16>, vector<32x128xbf16>, vector<16x128xf32> -> vector<16x128xf32>
    %c488 = arith.constant 488 : index
    %c0_44 = arith.constant 0 : index
    %64 = vector.load %arg13[%c488, %c0_44] : memref<504x1xf32, #tpu.memory_space<vmem>>, vector<16x1xf32>
    %65 = vector.broadcast %64 : vector<16x1xf32> to vector<16x128xf32>
    %66 = arith.addf %63, %65 : vector<16x128xf32>
    %c0_45 = arith.constant 0 : index
    %c0_46 = arith.constant 0 : index
    %67 = vector.load %arg14[%c0_45, %c0_46] : memref<16x128xf32, #tpu.memory_space<vmem>>, vector<16x128xf32>
    tpu.vector_store %arg14[%c0_45, %c0_46], %66 {strides = array<i32>} : memref<16x128xf32, #tpu.memory_space<vmem>>, vector<16x128xf32>,
    return
  }
  func.func @transform_0(%arg0: i32) -> (i32, i32) {
    %c0_i32 = arith.constant 0 : i32
    %c0_i32_0 = arith.constant 0 : i32
    return %c0_i32, %arg0 : i32, i32
  }
  func.func @transform_1(%arg0: i32) -> (i32, i32) {
    %c0_i32 = arith.constant 0 : i32
    %c0_i32_0 = arith.constant 0 : i32
    return %c0_i32, %arg0 : i32, i32
  }
  func.func @transform_2(%arg0: i32) -> (i32, i32) {
    %c0_i32 = arith.constant 0 : i32
    %c0_i32_0 = arith.constant 0 : i32
    %c0_i32_1 = arith.constant 0 : i32
    return %c0_i32, %c0_i32_0 : i32, i32
  }
  func.func @transform_3(%arg0: i32) -> (i32, i32) {
    %c0_i32 = arith.constant 0 : i32
    %c0_i32_0 = arith.constant 0 : i32
    %c0_i32_1 = arith.constant 0 : i32
    return %c0_i32, %c0_i32_0 : i32, i32
  }
  func.func @transform_4(%arg0: i32) -> (i32, i32) {
    %c0_i32 = arith.constant 0 : i32
    %c0_i32_0 = arith.constant 0 : i32
    %c0_i32_1 = arith.constant 0 : i32
    return %c0_i32, %c0_i32_0 : i32, i32
  }
  func.func @transform_5(%arg0: i32) -> (i32, i32) {
    %c0_i32 = arith.constant 0 : i32
    %c0_i32_0 = arith.constant 0 : i32
    %c0_i32_1 = arith.constant 0 : i32
    return %c0_i32, %c0_i32_0 : i32, i32
  }
  func.func @transform_6(%arg0: i32) -> (i32, i32) {
    %c0_i32 = arith.constant 0 : i32
    %c0_i32_0 = arith.constant 0 : i32
    %c0_i32_1 = arith.constant 0 : i32
    return %c0_i32, %c0_i32_0 : i32, i32
  }
  func.func @transform_7(%arg0: i32) -> (i32, i32) {
    %c0_i32 = arith.constant 0 : i32
    %c0_i32_0 = arith.constant 0 : i32
    %c0_i32_1 = arith.constant 0 : i32
    return %c0_i32, %c0_i32_0 : i32, i32
  }
  func.func @transform_8(%arg0: i32) -> (i32, i32) {
    %c0_i32 = arith.constant 0 : i32
    %c0_i32_0 = arith.constant 0 : i32
    %c0_i32_1 = arith.constant 0 : i32
    return %c0_i32, %c0_i32_0 : i32, i32
  }
  func.func @transform_9(%arg0: i32) -> (i32, i32) {
    %c0_i32 = arith.constant 0 : i32
    %c0_i32_0 = arith.constant 0 : i32
    %c0_i32_1 = arith.constant 0 : i32
    return %c0_i32, %c0_i32_0 : i32, i32
  }
  func.func @transform_10(%arg0: i32) -> (i32, i32) {
    %c0_i32 = arith.constant 0 : i32
    %c0_i32_0 = arith.constant 0 : i32
    %c0_i32_1 = arith.constant 0 : i32
    return %c0_i32, %c0_i32_0 : i32, i32
  }
  func.func @transform_11(%arg0: i32) -> (i32, i32) {
    %c0_i32 = arith.constant 0 : i32
    %c0_i32_0 = arith.constant 0 : i32
    %c0_i32_1 = arith.constant 0 : i32
    return %c0_i32, %c0_i32_0 : i32, i32
  }
  func.func @transform_12(%arg0: i32) -> (i32, i32) {
    %c0_i32 = arith.constant 0 : i32
    %c0_i32_0 = arith.constant 0 : i32
    %c0_i32_1 = arith.constant 0 : i32
    return %c0_i32, %c0_i32_0 : i32, i32
  }
  func.func @transform_13(%arg0: i32) -> (i32, i32) {
    %c0_i32 = arith.constant 0 : i32
    %c0_i32_0 = arith.constant 0 : i32
    return %c0_i32, %arg0 : i32, i32
  }
}

</mosaic_0001>

<llo_original>
// kernel: _lambda_.1
$region0: #{_lambda_.1}
  #allocation0 [shape = 'u32[]', space=smem, size = 0x4, offset = 0x4, fixed_abs, tag = 'smem constant byte address 0x4 - core index']
  #allocation1 [shape = 'u32[72,128]{1,0:T(1,128)}', space=vmem, size = 0x9000, scoped, tag = 'internal scratch']
  %s0 = inlined_call_operand.vmem [shape: bf16[12,128], index: 0, kind: input, shape index: {}]
  %s1 = inlined_call_operand.vmem [shape: bf16[67,128], index: 1, kind: input, shape index: {}]
  %s2 = inlined_call_operand.hbm [shape: bf16[240,12], index: 2, kind: input, shape index: {}]
  %s3 = inlined_call_operand.hbm [shape: bf16[240,1], index: 3, kind: input, shape index: {}]
  %s4 = inlined_call_operand.hbm [shape: bf16[256,67], index: 4, kind: input, shape index: {}]
  %s5 = inlined_call_operand.vmem [shape: bf16[256,240], index: 5, kind: input, shape index: {}]
  %s6 = inlined_call_operand.hbm [shape: bf16[128,256], index: 6, kind: input, shape index: {}]
  %s7 = inlined_call_operand.vmem [shape: bf16[32,128], index: 7, kind: input, shape index: {}]
  %s8 = inlined_call_operand.vmem [shape: bf16[8,32], index: 8, kind: input, shape index: {}]
  %s9 = inlined_call_operand.vmem [shape: bf16[32,8], index: 9, kind: input, shape index: {}]
  %s10 = inlined_call_operand.vmem [shape: bf16[32,32], index: 10, kind: input, shape index: {}]
  %s11 = inlined_call_operand.vmem [shape: bf16[16,32], index: 11, kind: input, shape index: {}]
  %s12 = inlined_call_operand.vmem [shape: f32[504,1], index: 12, kind: input, shape index: {}]
  %s13 = inlined_call_operand.vmem [shape: f32[16,128], index: 13, kind: output, shape index: {}]
  %s14 = sld [smem:[#allocation0]]
  $region78: #{_lambda_.1} parent=0
    _
  %s16 = ssub.s32 1, %s14
  %s17 = scalar_select 0, %s16, %s14
  $region1: #{_lambda_.1} parent=0
    #allocation2 [shape = 'u8[61440]{0}', space=vmem, size = 0xf000, scoped, tag = 'input window, operand 2, single buffered']
    #allocation3 [shape = 's32[1]{0}', space=sflag, size = 0x4, scoped, tag = 'scoped memory for _lambda_.1']
    #allocation4 [shape = 'u8[61440]{0}', space=vmem, size = 0xf000, scoped, tag = 'input window, operand 3, single buffered']
    #allocation5 [shape = 's32[1]{0}', space=sflag, size = 0x4, scoped, tag = 'scoped memory for _lambda_.1']
    #allocation6 [shape = 'u8[65536]{0}', space=vmem, size = 0x10000, scoped, tag = 'input window, operand 4, single buffered']
    #allocation7 [shape = 'u8[65536]{0}', space=vmem, size = 0x10000, scoped, tag = 'input window, operand 6, single buffered']
    #allocation8 [shape = 's32[1]{0}', space=sflag, size = 0x4, scoped, tag = 'scoped memory for _lambda_.1']
    %18 = vsyncpa [#allocation3], 0
    %19 = vsyncpa [#allocation5], 0
    %20 = vsyncpa [#allocation8], 0
    // Predicated region
    $region2: #{_lambda_.1} parent=1 // pred_check
      _
    $region3: #{_lambda_.1} parent=1 // pred_check_branch
      %22 = sbr.rel (0) target = $region5
    $region4: #{_lambda_.1} parent=1 // pred_region
      _
    $region5: #{_lambda_.1} parent=1 // pred_fallthru
      _
    // Predicated region
    $region6: #{_lambda_.1} parent=1 // pred_check
      _
    $region7: #{_lambda_.1} parent=1 // pred_check_branch
      %24 = sbr.rel (0) target = $region9
    $region8: #{_lambda_.1} parent=1 // pred_region
      _
    $region9: #{_lambda_.1} parent=1 // pred_fallthru
      _
    // Predicated region
    $region10: #{_lambda_.1} parent=1 // pred_check
      _
    $region11: #{_lambda_.1} parent=1 // pred_check_branch
      %26 = sbr.rel (0) target = $region13
    $region12: #{_lambda_.1} parent=1 // pred_region
      %28 = vsyncadd [#allocation3], 0
      %s29 = sshll.u32 %s2, 4
      %s30 = int_to_ptr.hbm [resolvable:$true] %s29
      %s31 = sshll.u32 [#allocation2], 4
      %s32 = int_to_ptr.vmem [resolvable:$true] %s31
      %37 = dma.hbm_to_vmem [thread:$0]  %s30, 1920, %s32, [#allocation3], 64, 64, 4
    $region13: #{_lambda_.1} parent=1 // pred_fallthru
      _
    // Predicated region
    $region14: #{_lambda_.1} parent=1 // pred_check
      _
    $region15: #{_lambda_.1} parent=1 // pred_check_branch
      %39 = sbr.rel (0) target = $region17
    $region16: #{_lambda_.1} parent=1 // pred_region
      %41 = vsyncadd [#allocation5], 0
      %s42 = sshll.u32 %s3, 4
      %s43 = int_to_ptr.hbm [resolvable:$true] %s42
      %s44 = sshll.u32 [#allocation4], 4
      %s45 = int_to_ptr.vmem [resolvable:$true] %s44
      %50 = dma.hbm_to_vmem [thread:$0]  %s43, 1920, %s45, [#allocation5], 64, 64, 4
    $region17: #{_lambda_.1} parent=1 // pred_fallthru
      _
    // Predicated region
    $region18: #{_lambda_.1} parent=1 // pred_check
      _
    $region19: #{_lambda_.1} parent=1 // pred_check_branch
      %52 = sbr.rel (0) target = $region21
    $region20: #{_lambda_.1} parent=1 // pred_region
      %54 = vsyncadd [#allocation5], 0
      %s55 = sshll.u32 %s4, 4
      %s56 = int_to_ptr.hbm [resolvable:$true] %s55
      %s57 = sshll.u32 [#allocation6], 4
      %s58 = int_to_ptr.vmem [resolvable:$true] %s57
      %63 = dma.hbm_to_vmem [thread:$0]  %s56, 2048, %s58, [#allocation5], 64, 64, 4
    $region21: #{_lambda_.1} parent=1 // pred_fallthru
      _
    // Predicated region
    $region22: #{_lambda_.1} parent=1 // pred_check
      _
    $region23: #{_lambda_.1} parent=1 // pred_check_branch
      %65 = sbr.rel (0) target = $region25
    $region24: #{_lambda_.1} parent=1 // pred_region
      _
    $region25: #{_lambda_.1} parent=1 // pred_fallthru
      _
    // Predicated region
    $region26: #{_lambda_.1} parent=1 // pred_check
      _
    $region27: #{_lambda_.1} parent=1 // pred_check_branch
      %67 = sbr.rel (0) target = $region29
    $region28: #{_lambda_.1} parent=1 // pred_region
      %69 = vsyncadd [#allocation8], 0
      %s70 = sshll.u32 %s6, 4
      %s71 = int_to_ptr.hbm [resolvable:$true] %s70
      %s72 = sshll.u32 [#allocation7], 4
      %s73 = int_to_ptr.vmem [resolvable:$true] %s72
      %78 = dma.hbm_to_vmem [thread:$0]  %s71, 2048, %s73, [#allocation8], 128, 128, 8
    $region29: #{_lambda_.1} parent=1 // pred_fallthru
      _
    // Predicated region
    $region30: #{_lambda_.1} parent=1 // pred_check
      _
    $region31: #{_lambda_.1} parent=1 // pred_check_branch
      %80 = sbr.rel (0) target = $region33
    $region32: #{_lambda_.1} parent=1 // pred_region
      _
    $region33: #{_lambda_.1} parent=1 // pred_fallthru
      _
    // Predicated region
    $region34: #{_lambda_.1} parent=1 // pred_check
      _
    $region35: #{_lambda_.1} parent=1 // pred_check_branch
      %82 = sbr.rel (0) target = $region37
    $region36: #{_lambda_.1} parent=1 // pred_region
      _
    $region37: #{_lambda_.1} parent=1 // pred_fallthru
      _
    // Predicated region
    $region38: #{_lambda_.1} parent=1 // pred_check
      _
    $region39: #{_lambda_.1} parent=1 // pred_check_branch
      %84 = sbr.rel (0) target = $region41
    $region40: #{_lambda_.1} parent=1 // pred_region
      _
    $region41: #{_lambda_.1} parent=1 // pred_fallthru
      _
    // Predicated region
    $region42: #{_lambda_.1} parent=1 // pred_check
      _
    $region43: #{_lambda_.1} parent=1 // pred_check_branch
      %86 = sbr.rel (0) target = $region45
    $region44: #{_lambda_.1} parent=1 // pred_region
      _
    $region45: #{_lambda_.1} parent=1 // pred_fallthru
      _
    // Predicated region
    $region46: #{_lambda_.1} parent=1 // pred_check
      _
    $region47: #{_lambda_.1} parent=1 // pred_check_branch
      %88 = sbr.rel (0) target = $region49
    $region48: #{_lambda_.1} parent=1 // pred_region
      _
    $region49: #{_lambda_.1} parent=1 // pred_fallthru
      _
    // Predicated region
    $region50: #{_lambda_.1} parent=1 // pred_check
      _
    $region51: #{_lambda_.1} parent=1 // pred_check_branch
      %90 = sbr.rel (0) target = $region53
    $region52: #{_lambda_.1} parent=1 // pred_region
      _
    $region53: #{_lambda_.1} parent=1 // pred_fallthru
      _
    // Predicated region
    $region54: #{_lambda_.1} parent=1 // pred_check
      _
    $region55: #{_lambda_.1} parent=1 // pred_check_branch
      %92 = sbr.rel (0) target = $region57
    $region56: #{_lambda_.1} parent=1 // pred_region
      %94 = dma.done [#allocation3], 1920
    $region57: #{_lambda_.1} parent=1 // pred_fallthru
      _
    // Predicated region
    $region58: #{_lambda_.1} parent=1 // pred_check
      _
    $region59: #{_lambda_.1} parent=1 // pred_check_branch
      %96 = sbr.rel (0) target = $region61
    $region60: #{_lambda_.1} parent=1 // pred_region
      %98 = dma.done [#allocation5], 1920
    $region61: #{_lambda_.1} parent=1 // pred_fallthru
      _
    // Predicated region
    $region62: #{_lambda_.1} parent=1 // pred_check
      _
    $region63: #{_lambda_.1} parent=1 // pred_check_branch
      %100 = sbr.rel (0) target = $region65
    $region64: #{_lambda_.1} parent=1 // pred_region
      %102 = dma.done [#allocation5], 2048
    $region65: #{_lambda_.1} parent=1 // pred_fallthru
      _
    // Predicated region
    $region66: #{_lambda_.1} parent=1 // pred_check
      _
    $region67: #{_lambda_.1} parent=1 // pred_check_branch
      %104 = sbr.rel (0) target = $region69
    $region68: #{_lambda_.1} parent=1 // pred_region
      %106 = dma.done [#allocation8], 2048
    $region69: #{_lambda_.1} parent=1 // pred_fallthru
      _
    %v108 = vld [vmem:[%s0] sm:$0xf]
    %v109 = vld [vmem:[%s0 + $0x4] sm:$0x3]
    %v110 = vld [vmem:[%s1] sm:$0xf]
    %v111 = vld [vmem:[%s1 + $0x4] sm:$0xf]
    %v112 = vld [vmem:[%s1 + $0x8] sm:$0xf]
    %v113 = vld [vmem:[%s1 + $0xc] sm:$0xf]
    %v114 = vld [vmem:[%s1 + $0x10] sm:$0xf]
    %v115 = vld [vmem:[%s1 + $0x14] sm:$0xf]
    %v116 = vld [vmem:[%s1 + $0x18] sm:$0xf]
    %v117 = vld [vmem:[%s1 + $0x1c] sm:$0xf]
    %v118 = vld [vmem:[%s1 + $0x20] sm:$0x3]
    %v119 = vld [vmem:[#allocation2] sm:$0xf]
    %v120 = vld [vmem:[#allocation2 + $0x4] sm:$0xf]
    %v121 = vld [vmem:[#allocation2 + $0x8] sm:$0xf]
    %v122 = vld [vmem:[#allocation2 + $0xc] sm:$0xf]
    %v123 = vld [vmem:[#allocation2 + $0x10] sm:$0xf]
    %v124 = vld [vmem:[#allocation2 + $0x14] sm:$0xf]
    %v125 = vld [vmem:[#allocation2 + $0x18] sm:$0xf]
    %v126 = vld [vmem:[#allocation2 + $0x1c] sm:$0xf]
    %v127 = vld [vmem:[#allocation2 + $0x20] sm:$0xf]
    %v128 = vld [vmem:[#allocation2 + $0x24] sm:$0xf]
    %v129 = vld [vmem:[#allocation2 + $0x28] sm:$0xf]
    %v130 = vld [vmem:[#allocation2 + $0x2c] sm:$0xf]
    %v131 = vld [vmem:[#allocation2 + $0x30] sm:$0xf]
    %v132 = vld [vmem:[#allocation2 + $0x34] sm:$0xf]
    %v133 = vld [vmem:[#allocation2 + $0x38] sm:$0xf]
    %v134 = vld [vmem:[#allocation2 + $0x3c] sm:$0xf]
    %v135 = vld [vmem:[#allocation2 + $0x40] sm:$0xf]
    %v136 = vld [vmem:[#allocation2 + $0x44] sm:$0xf]
    %v137 = vld [vmem:[#allocation2 + $0x48] sm:$0xf]
    %v138 = vld [vmem:[#allocation2 + $0x4c] sm:$0xf]
    %v139 = vld [vmem:[#allocation2 + $0x50] sm:$0xf]
    %v140 = vld [vmem:[#allocation2 + $0x54] sm:$0xf]
    %v141 = vld [vmem:[#allocation2 + $0x58] sm:$0xf]
    %v142 = vld [vmem:[#allocation2 + $0x5c] sm:$0xf]
    %v143 = vld [vmem:[#allocation2 + $0x60] sm:$0xf]
    %v144 = vld [vmem:[#allocation2 + $0x64] sm:$0xf]
    %v145 = vld [vmem:[#allocation2 + $0x68] sm:$0xf]
    %v146 = vld [vmem:[#allocation2 + $0x6c] sm:$0xf]
    %v147 = vld [vmem:[#allocation2 + $0x70] sm:$0xf]
    %v148 = vld [vmem:[#allocation2 + $0x74] sm:$0xf]
    %v179 = vunpack.c.l.b16 %v119
    %v180 = vunpack.c.l.b16 %v120
    %v181 = vunpack.c.l.b16 %v121
    %v182 = vunpack.c.l.b16 %v122
    %v183 = vunpack.c.l.b16 %v123
    %v184 = vunpack.c.l.b16 %v124
    %v185 = vunpack.c.l.b16 %v125
    %v186 = vunpack.c.l.b16 %v126
    %v187 = vunpack.c.l.b16 %v127
    %v188 = vunpack.c.l.b16 %v128
    %v189 = vunpack.c.l.b16 %v129
    %v190 = vunpack.c.l.b16 %v130
    %v191 = vunpack.c.l.b16 %v131
    %v192 = vunpack.c.l.b16 %v132
    %v193 = vunpack.c.l.b16 %v133
    %v194 = vunpack.c.l.b16 %v134
    %v195 = vunpack.c.l.b16 %v135
    %v196 = vunpack.c.l.b16 %v136
    %v197 = vunpack.c.l.b16 %v137
    %v198 = vunpack.c.l.b16 %v138
    %v199 = vunpack.c.l.b16 %v139
    %v200 = vunpack.c.l.b16 %v140
    %v201 = vunpack.c.l.b16 %v141
    %v202 = vunpack.c.l.b16 %v142
    %v203 = vunpack.c.l.b16 %v143
    %v204 = vunpack.c.l.b16 %v144
    %v205 = vunpack.c.l.b16 %v145
    %v206 = vunpack.c.l.b16 %v146
    %v207 = vunpack.c.l.b16 %v147
    %v208 = vunpack.c.l.b16 %v148
    %v209 = vpack.c.b16 %v180, %v179
    %v210 = vpack.c.b16 %v182, %v181
    %v211 = vpack.c.b16 %v184, %v183
    %v212 = vpack.c.b16 %v186, %v185
    %v213 = vpack.c.b16 %v188, %v187
    %v214 = vpack.c.b16 %v190, %v189
    %v215 = vpack.c.b16 %v192, %v191
    %v216 = vpack.c.b16 %v194, %v193
    %v217 = vpack.c.b16 %v196, %v195
    %v218 = vpack.c.b16 %v198, %v197
    %v219 = vpack.c.b16 %v200, %v199
    %v220 = vpack.c.b16 %v202, %v201
    %v221 = vpack.c.b16 %v204, %v203
    %v222 = vpack.c.b16 %v206, %v205
    %v223 = vpack.c.b16 %v208, %v207
    %v226 = vunpack.c.l.b16 %v108
    %v227 = vunpack.c.l.b16 %v109
    %v228 = vpack.c.b16 %v227, %v226
    %vm229 = vcmask 97280
    %v231 = vsel %vm229, %v209, 0
    %v234 = vsel %vm229, %v210, 0
    %v237 = vsel %vm229, %v211, 0
    %v240 = vsel %vm229, %v212, 0
    %v243 = vsel %vm229, %v213, 0
    %v246 = vsel %vm229, %v214, 0
    %v249 = vsel %vm229, %v215, 0
    %v252 = vsel %vm229, %v216, 0
    %v255 = vsel %vm229, %v217, 0
    %v258 = vsel %vm229, %v218, 0
    %v261 = vsel %vm229, %v219, 0
    %v264 = vsel %vm229, %v220, 0
    %v267 = vsel %vm229, %v221, 0
    %v270 = vsel %vm229, %v222, 0
    %v273 = vsel %vm229, %v223, 0
    %vm275 = vcmask 1045504
    %v277 = vsel %vm275, %v228, 0
    %279 = vmatpush.bf16.msra.mxu0 0
    %280 = vmatpush.bf16.msra.mxu0 0
    %281 = vmatpush.bf16.msra.mxu0 0
    %282 = vmatpush.bf16.msra.mxu0 0
    %283 = vmatpush.bf16.msra.mxu0 0
    %284 = vmatpush.bf16.msra.mxu0 0
    %285 = vmatpush.bf16.msra.mxu0 0
    %286 = vmatpush.bf16.msra.mxu0 %v277
    %287 = vmatmul.bf16.gmra.mxu0 %v231
    %v288 = vpop.f32.mrf.mxu0
    %v289 = vadd.f32 0.0, %v288
    %v290 = vpop.f32.mrf.mxu0
    %v291 = vadd.f32 0.0, %v290
    %292 = vmatmul.bf16.gmra.mxu0 %v234
    %v293 = vpop.f32.mrf.mxu0
    %v294 = vadd.f32 0.0, %v293
    %v295 = vpop.f32.mrf.mxu0
    %v296 = vadd.f32 0.0, %v295
    %297 = vmatmul.bf16.gmra.mxu0 %v237
    %v298 = vpop.f32.mrf.mxu0
    %v299 = vadd.f32 0.0, %v298
    %v300 = vpop.f32.mrf.mxu0
    %v301 = vadd.f32 0.0, %v300
    %302 = vmatmul.bf16.gmra.mxu0 %v240
    %v303 = vpop.f32.mrf.mxu0
    %v304 = vadd.f32 0.0, %v303
    %v305 = vpop.f32.mrf.mxu0
    %v306 = vadd.f32 0.0, %v305
    %307 = vmatmul.bf16.gmra.mxu0 %v243
    %v308 = vpop.f32.mrf.mxu0
    %v309 = vadd.f32 0.0, %v308
    %v310 = vpop.f32.mrf.mxu0
    %v311 = vadd.f32 0.0, %v310
    %312 = vmatmul.bf16.gmra.mxu0 %v246
    %v313 = vpop.f32.mrf.mxu0
    %v314 = vadd.f32 0.0, %v313
    %v315 = vpop.f32.mrf.mxu0
    %v316 = vadd.f32 0.0, %v315
    %317 = vmatmul.bf16.gmra.mxu0 %v249
    %v318 = vpop.f32.mrf.mxu0
    %v319 = vadd.f32 0.0, %v318
    %v320 = vpop.f32.mrf.mxu0
    %v321 = vadd.f32 0.0, %v320
    %322 = vmatmul.bf16.gmra.mxu0 %v252
    %v323 = vpop.f32.mrf.mxu0
    %v324 = vadd.f32 0.0, %v323
    %v325 = vpop.f32.mrf.mxu0
    %v326 = vadd.f32 0.0, %v325
    %327 = vmatmul.bf16.gmra.mxu0 %v255
    %v328 = vpop.f32.mrf.mxu0
    %v329 = vadd.f32 0.0, %v328
    %v330 = vpop.f32.mrf.mxu0
    %v331 = vadd.f32 0.0, %v330
    %332 = vmatmul.bf16.gmra.mxu0 %v258
    %v333 = vpop.f32.mrf.mxu0
    %v334 = vadd.f32 0.0, %v333
    %v335 = vpop.f32.mrf.mxu0
    %v336 = vadd.f32 0.0, %v335
    %337 = vmatmul.bf16.gmra.mxu0 %v261
    %v338 = vpop.f32.mrf.mxu0
    %v339 = vadd.f32 0.0, %v338
    %v340 = vpop.f32.mrf.mxu0
    %v341 = vadd.f32 0.0, %v340
    %342 = vmatmul.bf16.gmra.mxu0 %v264
    %v343 = vpop.f32.mrf.mxu0
    %v344 = vadd.f32 0.0, %v343
    %v345 = vpop.f32.mrf.mxu0
    %v346 = vadd.f32 0.0, %v345
    %347 = vmatmul.bf16.gmra.mxu0 %v267
    %v348 = vpop.f32.mrf.mxu0
    %v349 = vadd.f32 0.0, %v348
    %v350 = vpop.f32.mrf.mxu0
    %v351 = vadd.f32 0.0, %v350
    %352 = vmatmul.bf16.gmra.mxu0 %v270
    %v353 = vpop.f32.mrf.mxu0
    %v354 = vadd.f32 0.0, %v353
    %v355 = vpop.f32.mrf.mxu0
    %v356 = vadd.f32 0.0, %v355
    %357 = vmatmul.bf16.gmra.mxu0 %v273
    %v358 = vpop.f32.mrf.mxu0
    %v359 = vadd.f32 0.0, %v358
    %v360 = vpop.f32.mrf.mxu0
    %v361 = vadd.f32 0.0, %v360
    %362 = vdwg.mxu0
    %v363 = vld [vmem:[#allocation4] sm:$0xf]
    %v364 = vld [vmem:[#allocation4 + $0x4] sm:$0xf]
    %v365 = vld [vmem:[#allocation4 + $0x8] sm:$0xf]
    %v366 = vld [vmem:[#allocation4 + $0xc] sm:$0xf]
    %v367 = vld [vmem:[#allocation4 + $0x10] sm:$0xf]
    %v368 = vld [vmem:[#allocation4 + $0x14] sm:$0xf]
    %v369 = vld [vmem:[#allocation4 + $0x18] sm:$0xf]
    %v370 = vld [vmem:[#allocation4 + $0x1c] sm:$0xf]
    %v371 = vld [vmem:[#allocation4 + $0x20] sm:$0xf]
    %v372 = vld [vmem:[#allocation4 + $0x24] sm:$0xf]
    %v373 = vld [vmem:[#allocation4 + $0x28] sm:$0xf]
    %v374 = vld [vmem:[#allocation4 + $0x2c] sm:$0xf]
    %v375 = vld [vmem:[#allocation4 + $0x30] sm:$0xf]
    %v376 = vld [vmem:[#allocation4 + $0x34] sm:$0xf]
    %v377 = vld [vmem:[#allocation4 + $0x38] sm:$0xf]
    %v378 = vld [vmem:[#allocation4 + $0x3c] sm:$0xf]
    %v379 = vld [vmem:[#allocation4 + $0x40] sm:$0xf]
    %v380 = vld [vmem:[#allocation4 + $0x44] sm:$0xf]
    %v381 = vld [vmem:[#allocation4 + $0x48] sm:$0xf]
    %v382 = vld [vmem:[#allocation4 + $0x4c] sm:$0xf]
    %v383 = vld [vmem:[#allocation4 + $0x50] sm:$0xf]
    %v384 = vld [vmem:[#allocation4 + $0x54] sm:$0xf]
    %v385 = vld [vmem:[#allocation4 + $0x58] sm:$0xf]
    %v386 = vld [vmem:[#allocation4 + $0x5c] sm:$0xf]
    %v387 = vld [vmem:[#allocation4 + $0x60] sm:$0xf]
    %v388 = vld [vmem:[#allocation4 + $0x64] sm:$0xf]
    %v389 = vld [vmem:[#allocation4 + $0x68] sm:$0xf]
    %v390 = vld [vmem:[#allocation4 + $0x6c] sm:$0xf]
    %v391 = vld [vmem:[#allocation4 + $0x70] sm:$0xf]
    %v392 = vld [vmem:[#allocation4 + $0x74] sm:$0xf]
    %v393 = vunpack.c.l.bf16 %v363
    %v394 = vunpack.c.l.bf16 %v364
    %v395 = vunpack.c.l.bf16 %v365
    %v396 = vunpack.c.l.bf16 %v366
    %v397 = vunpack.c.l.bf16 %v367
    %v398 = vunpack.c.l.bf16 %v368
    %v399 = vunpack.c.l.bf16 %v369
    %v400 = vunpack.c.l.bf16 %v370
    %v401 = vunpack.c.l.bf16 %v371
    %v402 = vunpack.c.l.bf16 %v372
    %v403 = vunpack.c.l.bf16 %v373
    %v404 = vunpack.c.l.bf16 %v374
    %v405 = vunpack.c.l.bf16 %v375
    %v406 = vunpack.c.l.bf16 %v376
    %v407 = vunpack.c.l.bf16 %v377
    %v408 = vunpack.c.l.bf16 %v378
    %v409 = vunpack.c.l.bf16 %v379
    %v410 = vunpack.c.l.bf16 %v380
    %v411 = vunpack.c.l.bf16 %v381
    %v412 = vunpack.c.l.bf16 %v382
    %v413 = vunpack.c.l.bf16 %v383
    %v414 = vunpack.c.l.bf16 %v384
    %v415 = vunpack.c.l.bf16 %v385
    %v416 = vunpack.c.l.bf16 %v386
    %v417 = vunpack.c.l.bf16 %v387
    %v418 = vunpack.c.l.bf16 %v388
    %v419 = vunpack.c.l.bf16 %v389
    %v420 = vunpack.c.l.bf16 %v390
    %v421 = vunpack.c.l.bf16 %v391
    %v422 = vunpack.c.l.bf16 %v392
    %424 = vset.pattern.permute.xlu0 0
    %425 = vperm.xlu0 %424, %v393
    %v426 = vpop.permute.xlu0 %425
    %429 = vset.pattern.permute.xlu0 0
    %430 = vperm.xlu0 %429, %v394
    %v431 = vpop.permute.xlu0 %430
    %434 = vset.pattern.permute.xlu0 0
    %435 = vperm.xlu0 %434, %v395
    %v436 = vpop.permute.xlu0 %435
    %439 = vset.pattern.permute.xlu0 0
    %440 = vperm.xlu0 %439, %v396
    %v441 = vpop.permute.xlu0 %440
    %444 = vset.pattern.permute.xlu0 0
    %445 = vperm.xlu0 %444, %v397
    %v446 = vpop.permute.xlu0 %445
    %449 = vset.pattern.permute.xlu0 0
    %450 = vperm.xlu0 %449, %v398
    %v451 = vpop.permute.xlu0 %450
    %454 = vset.pattern.permute.xlu0 0
    %455 = vperm.xlu0 %454, %v399
    %v456 = vpop.permute.xlu0 %455
    %459 = vset.pattern.permute.xlu0 0
    %460 = vperm.xlu0 %459, %v400
    %v461 = vpop.permute.xlu0 %460
    %464 = vset.pattern.permute.xlu0 0
    %465 = vperm.xlu0 %464, %v401
    %v466 = vpop.permute.xlu0 %465
    %469 = vset.pattern.permute.xlu0 0
    %470 = vperm.xlu0 %469, %v402
    %v471 = vpop.permute.xlu0 %470
    %474 = vset.pattern.permute.xlu0 0
    %475 = vperm.xlu0 %474, %v403
    %v476 = vpop.permute.xlu0 %475
    %479 = vset.pattern.permute.xlu0 0
    %480 = vperm.xlu0 %479, %v404
    %v481 = vpop.permute.xlu0 %480
    %484 = vset.pattern.permute.xlu0 0
    %485 = vperm.xlu0 %484, %v405
    %v486 = vpop.permute.xlu0 %485
    %489 = vset.pattern.permute.xlu0 0
    %490 = vperm.xlu0 %489, %v406
    %v491 = vpop.permute.xlu0 %490
    %494 = vset.pattern.permute.xlu0 0
    %495 = vperm.xlu0 %494, %v407
    %v496 = vpop.permute.xlu0 %495
    %499 = vset.pattern.permute.xlu0 0
    %500 = vperm.xlu0 %499, %v408
    %v501 = vpop.permute.xlu0 %500
    %504 = vset.pattern.permute.xlu0 0
    %505 = vperm.xlu0 %504, %v409
    %v506 = vpop.permute.xlu0 %505
    %509 = vset.pattern.permute.xlu0 0
    %510 = vperm.xlu0 %509, %v410
    %v511 = vpop.permute.xlu0 %510
    %514 = vset.pattern.permute.xlu0 0
    %515 = vperm.xlu0 %514, %v411
    %v516 = vpop.permute.xlu0 %515
    %519 = vset.pattern.permute.xlu0 0
    %520 = vperm.xlu0 %519, %v412
    %v521 = vpop.permute.xlu0 %520
    %524 = vset.pattern.permute.xlu0 0
    %525 = vperm.xlu0 %524, %v413
    %v526 = vpop.permute.xlu0 %525
    %529 = vset.pattern.permute.xlu0 0
    %530 = vperm.xlu0 %529, %v414
    %v531 = vpop.permute.xlu0 %530
    %534 = vset.pattern.permute.xlu0 0
    %535 = vperm.xlu0 %534, %v415
    %v536 = vpop.permute.xlu0 %535
    %539 = vset.pattern.permute.xlu0 0
    %540 = vperm.xlu0 %539, %v416
    %v541 = vpop.permute.xlu0 %540
    %544 = vset.pattern.permute.xlu0 0
    %545 = vperm.xlu0 %544, %v417
    %v546 = vpop.permute.xlu0 %545
    %549 = vset.pattern.permute.xlu0 0
    %550 = vperm.xlu0 %549, %v418
    %v551 = vpop.permute.xlu0 %550
    %554 = vset.pattern.permute.xlu0 0
    %555 = vperm.xlu0 %554, %v419
    %v556 = vpop.permute.xlu0 %555
    %559 = vset.pattern.permute.xlu0 0
    %560 = vperm.xlu0 %559, %v420
    %v561 = vpop.permute.xlu0 %560
    %564 = vset.pattern.permute.xlu0 0
    %565 = vperm.xlu0 %564, %v421
    %v566 = vpop.permute.xlu0 %565
    %569 = vset.pattern.permute.xlu0 0
    %570 = vperm.xlu0 %569, %v422
    %v571 = vpop.permute.xlu0 %570
    %vm573 = vcmp.eq.f32.partialorder %v289, %v426
    %vm574 = vcmp.eq.f32.partialorder %v291, %v431
    %vm575 = vcmp.eq.f32.partialorder %v294, %v436
    %vm576 = vcmp.eq.f32.partialorder %v296, %v441
    %vm577 = vcmp.eq.f32.partialorder %v299, %v446
    %vm578 = vcmp.eq.f32.partialorder %v301, %v451
    %vm579 = vcmp.eq.f32.partialorder %v304, %v456
    %vm580 = vcmp.eq.f32.partialorder %v306, %v461
    %vm581 = vcmp.eq.f32.partialorder %v309, %v466
    %vm582 = vcmp.eq.f32.partialorder %v311, %v471
    %vm583 = vcmp.eq.f32.partialorder %v314, %v476
    %vm584 = vcmp.eq.f32.partialorder %v316, %v481
    %vm585 = vcmp.eq.f32.partialorder %v319, %v486
    %vm586 = vcmp.eq.f32.partialorder %v321, %v491
    %vm587 = vcmp.eq.f32.partialorder %v324, %v496
    %vm588 = vcmp.eq.f32.partialorder %v326, %v501
    %vm589 = vcmp.eq.f32.partialorder %v329, %v506
    %vm590 = vcmp.eq.f32.partialorder %v331, %v511
    %vm591 = vcmp.eq.f32.partialorder %v334, %v516
    %vm592 = vcmp.eq.f32.partialorder %v336, %v521
    %vm593 = vcmp.eq.f32.partialorder %v339, %v526
    %vm594 = vcmp.eq.f32.partialorder %v341, %v531
    %vm595 = vcmp.eq.f32.partialorder %v344, %v536
    %vm596 = vcmp.eq.f32.partialorder %v346, %v541
    %vm597 = vcmp.eq.f32.partialorder %v349, %v546
    %vm598 = vcmp.eq.f32.partialorder %v351, %v551
    %vm599 = vcmp.eq.f32.partialorder %v354, %v556
    %vm600 = vcmp.eq.f32.partialorder %v356, %v561
    %vm601 = vcmp.eq.f32.partialorder %v359, %v566
    %vm602 = vcmp.eq.f32.partialorder %v361, %v571
    %v603 = vsel %vm573, 1, 0
    %v604 = vsel %vm574, 1, 0
    %v605 = vsel %vm575, 1, 0
    %v606 = vsel %vm576, 1, 0
    %v607 = vsel %vm577, 1, 0
    %v608 = vsel %vm578, 1, 0
    %v609 = vsel %vm579, 1, 0
    %v610 = vsel %vm580, 1, 0
    %v611 = vsel %vm581, 1, 0
    %v612 = vsel %vm582, 1, 0
    %v613 = vsel %vm583, 1, 0
    %v614 = vsel %vm584, 1, 0
    %v615 = vsel %vm585, 1, 0
    %v616 = vsel %vm586, 1, 0
    %v617 = vsel %vm587, 1, 0
    %v618 = vsel %vm588, 1, 0
    %v619 = vsel %vm589, 1, 0
    %v620 = vsel %vm590, 1, 0
    %v621 = vsel %vm591, 1, 0
    %v622 = vsel %vm592, 1, 0
    %v623 = vsel %vm593, 1, 0
    %v624 = vsel %vm594, 1, 0
    %v625 = vsel %vm595, 1, 0
    %v626 = vsel %vm596, 1, 0
    %v627 = vsel %vm597, 1, 0
    %v628 = vsel %vm598, 1, 0
    %v629 = vsel %vm599, 1, 0
    %v630 = vsel %vm600, 1, 0
    %v631 = vsel %vm601, 1, 0
    %v632 = vsel %vm602, 1, 0
    %v633 = vcvt.s32.f32 %v603
    %v634 = vcvt.s32.f32 %v604
    %v635 = vcvt.s32.f32 %v605
    %v636 = vcvt.s32.f32 %v606
    %v637 = vcvt.s32.f32 %v607
    %v638 = vcvt.s32.f32 %v608
    %v639 = vcvt.s32.f32 %v609
    %v640 = vcvt.s32.f32 %v610
    %v641 = vcvt.s32.f32 %v611
    %v642 = vcvt.s32.f32 %v612
    %v643 = vcvt.s32.f32 %v613
    %v644 = vcvt.s32.f32 %v614
    %v645 = vcvt.s32.f32 %v615
    %v646 = vcvt.s32.f32 %v616
    %v647 = vcvt.s32.f32 %v617
    %v648 = vcvt.s32.f32 %v618
    %v649 = vcvt.s32.f32 %v619
    %v650 = vcvt.s32.f32 %v620
    %v651 = vcvt.s32.f32 %v621
    %v652 = vcvt.s32.f32 %v622
    %v653 = vcvt.s32.f32 %v623
    %v654 = vcvt.s32.f32 %v624
    %v655 = vcvt.s32.f32 %v625
    %v656 = vcvt.s32.f32 %v626
    %v657 = vcvt.s32.f32 %v627
    %v658 = vcvt.s32.f32 %v628
    %v659 = vcvt.s32.f32 %v629
    %v660 = vcvt.s32.f32 %v630
    %v661 = vcvt.s32.f32 %v631
    %v662 = vcvt.s32.f32 %v632
    %v663 = vpack.c.bf16 %v634, %v633
    %v664 = vpack.c.bf16 %v636, %v635
    %v665 = vpack.c.bf16 %v638, %v637
    %v666 = vpack.c.bf16 %v640, %v639
    %v667 = vpack.c.bf16 %v642, %v641
    %v668 = vpack.c.bf16 %v644, %v643
    %v669 = vpack.c.bf16 %v646, %v645
    %v670 = vpack.c.bf16 %v648, %v647
    %v671 = vpack.c.bf16 %v650, %v649
    %v672 = vpack.c.bf16 %v652, %v651
    %v673 = vpack.c.bf16 %v654, %v653
    %v674 = vpack.c.bf16 %v656, %v655
    %v675 = vpack.c.bf16 %v658, %v657
    %v676 = vpack.c.bf16 %v660, %v659
    %v677 = vpack.c.bf16 %v662, %v661
    %v678 = vld [vmem:[#allocation6] sm:$0xf]
    %v679 = vld [vmem:[#allocation6 + $0x4] sm:$0xf]
    %v680 = vld [vmem:[#allocation6 + $0x8] sm:$0xf]
    %v681 = vld [vmem:[#allocation6 + $0xc] sm:$0xf]
    %v682 = vld [vmem:[#allocation6 + $0x10] sm:$0xf]
    %v683 = vld [vmem:[#allocation6 + $0x14] sm:$0xf]
    %v684 = vld [vmem:[#allocation6 + $0x18] sm:$0xf]
    %v685 = vld [vmem:[#allocation6 + $0x1c] sm:$0xf]
    %v686 = vld [vmem:[#allocation6 + $0x20] sm:$0xf]
    %v687 = vld [vmem:[#allocation6 + $0x24] sm:$0xf]
    %v688 = vld [vmem:[#allocation6 + $0x28] sm:$0xf]
    %v689 = vld [vmem:[#allocation6 + $0x2c] sm:$0xf]
    %v690 = vld [vmem:[#allocation6 + $0x30] sm:$0xf]
    %v691 = vld [vmem:[#allocation6 + $0x34] sm:$0xf]
    %v692 = vld [vmem:[#allocation6 + $0x38] sm:$0xf]
    %v693 = vld [vmem:[#allocation6 + $0x3c] sm:$0xf]
    %v694 = vld [vmem:[#allocation6 + $0x40] sm:$0xf]
    %v695 = vld [vmem:[#allocation6 + $0x44] sm:$0xf]
    %v696 = vld [vmem:[#allocation6 + $0x48] sm:$0xf]
    %v697 = vld [vmem:[#allocation6 + $0x4c] sm:$0xf]
    %v698 = vld [vmem:[#allocation6 + $0x50] sm:$0xf]
    %v699 = vld [vmem:[#allocation6 + $0x54] sm:$0xf]
    %v700 = vld [vmem:[#allocation6 + $0x58] sm:$0xf]
    %v701 = vld [vmem:[#allocation6 + $0x5c] sm:$0xf]
    %v702 = vld [vmem:[#allocation6 + $0x60] sm:$0xf]
    %v703 = vld [vmem:[#allocation6 + $0x64] sm:$0xf]
    %v704 = vld [vmem:[#allocation6 + $0x68] sm:$0xf]
    %v705 = vld [vmem:[#allocation6 + $0x6c] sm:$0xf]
    %v706 = vld [vmem:[#allocation6 + $0x70] sm:$0xf]
    %v707 = vld [vmem:[#allocation6 + $0x74] sm:$0xf]
    %v708 = vld [vmem:[#allocation6 + $0x78] sm:$0xf]
    %v709 = vld [vmem:[#allocation6 + $0x7c] sm:$0xf]
    %v710 = vld [vmem:[%s5] sm:$0xff]
    %v711 = vld [vmem:[%s5 + $0x8] sm:$0xff]
    %v712 = vld [vmem:[%s5 + $0x10] sm:$0xff]
    %v713 = vld [vmem:[%s5 + $0x18] sm:$0xff]
    %v714 = vld [vmem:[%s5 + $0x20] sm:$0xff]
    %v715 = vld [vmem:[%s5 + $0x28] sm:$0xff]
    %v716 = vld [vmem:[%s5 + $0x30] sm:$0xff]
    %v717 = vld [vmem:[%s5 + $0x38] sm:$0xff]
    %v718 = vld [vmem:[%s5 + $0x40] sm:$0xff]
    %v719 = vld [vmem:[%s5 + $0x48] sm:$0xff]
    %v720 = vld [vmem:[%s5 + $0x50] sm:$0xff]
    %v721 = vld [vmem:[%s5 + $0x58] sm:$0xff]
    %v722 = vld [vmem:[%s5 + $0x60] sm:$0xff]
    %v723 = vld [vmem:[%s5 + $0x68] sm:$0xff]
    %v724 = vld [vmem:[%s5 + $0x70] sm:$0xff]
    %v725 = vld [vmem:[%s5 + $0x78] sm:$0xff]
    %v726 = vld [vmem:[%s5 + $0x80] sm:$0xff]
    %v727 = vld [vmem:[%s5 + $0x88] sm:$0xff]
    %v728 = vld [vmem:[%s5 + $0x90] sm:$0xff]
    %v729 = vld [vmem:[%s5 + $0x98] sm:$0xff]
    %v730 = vld [vmem:[%s5 + $0xa0] sm:$0xff]
    %v731 = vld [vmem:[%s5 + $0xa8] sm:$0xff]
    %v732 = vld [vmem:[%s5 + $0xb0] sm:$0xff]
    %v733 = vld [vmem:[%s5 + $0xb8] sm:$0xff]
    %v734 = vld [vmem:[%s5 + $0xc0] sm:$0xff]
    %v735 = vld [vmem:[%s5 + $0xc8] sm:$0xff]
    %v736 = vld [vmem:[%s5 + $0xd0] sm:$0xff]
    %v737 = vld [vmem:[%s5 + $0xd8] sm:$0xff]
    %v738 = vld [vmem:[%s5 + $0xe0] sm:$0xff]
    %v739 = vld [vmem:[%s5 + $0xe8] sm:$0xff]
    %v740 = vld [vmem:[%s5 + $0xf0] sm:$0xff]
    %v741 = vld [vmem:[%s5 + $0xf8] sm:$0xff]
    %v774 = vunpack.c.l.b16 %v710
    %v775 = vunpack.c.h.b16 %v710
    %v776 = vunpack.c.l.b16 %v711
    %v777 = vunpack.c.h.b16 %v711
    %v778 = vunpack.c.l.b16 %v712
    %v779 = vunpack.c.h.b16 %v712
    %v780 = vunpack.c.l.b16 %v713
    %v781 = vunpack.c.h.b16 %v713
    %v782 = vunpack.c.l.b16 %v714
    %v783 = vunpack.c.h.b16 %v714
    %v784 = vunpack.c.l.b16 %v715
    %v785 = vunpack.c.h.b16 %v715
    %v786 = vunpack.c.l.b16 %v716
    %v787 = vunpack.c.h.b16 %v716
    %v788 = vunpack.c.l.b16 %v717
    %v789 = vunpack.c.h.b16 %v717
    %v790 = vunpack.c.l.b16 %v718
    %v791 = vunpack.c.h.b16 %v718
    %v792 = vunpack.c.l.b16 %v719
    %v793 = vunpack.c.h.b16 %v719
    %v794 = vunpack.c.l.b16 %v720
    %v795 = vunpack.c.h.b16 %v720
    %v796 = vunpack.c.l.b16 %v721
    %v797 = vunpack.c.h.b16 %v721
    %v798 = vunpack.c.l.b16 %v722
    %v799 = vunpack.c.h.b16 %v722
    %v800 = vunpack.c.l.b16 %v723
    %v801 = vunpack.c.h.b16 %v723
    %v802 = vunpack.c.l.b16 %v724
    %v803 = vunpack.c.h.b16 %v724
    %v804 = vunpack.c.l.b16 %v725
    %v805 = vunpack.c.h.b16 %v725
    %v806 = vunpack.c.l.b16 %v726
    %v807 = vunpack.c.h.b16 %v726
    %v808 = vunpack.c.l.b16 %v727
    %v809 = vunpack.c.h.b16 %v727
    %v810 = vunpack.c.l.b16 %v728
    %v811 = vunpack.c.h.b16 %v728
    %v812 = vunpack.c.l.b16 %v729
    %v813 = vunpack.c.h.b16 %v729
    %v814 = vunpack.c.l.b16 %v730
    %v815 = vunpack.c.h.b16 %v730
    %v816 = vunpack.c.l.b16 %v731
    %v817 = vunpack.c.h.b16 %v731
    %v818 = vunpack.c.l.b16 %v732
    %v819 = vunpack.c.h.b16 %v732
    %v820 = vunpack.c.l.b16 %v733
    %v821 = vunpack.c.h.b16 %v733
    %v822 = vunpack.c.l.b16 %v734
    %v823 = vunpack.c.h.b16 %v734
    %v824 = vunpack.c.l.b16 %v735
    %v825 = vunpack.c.h.b16 %v735
    %v826 = vunpack.c.l.b16 %v736
    %v827 = vunpack.c.h.b16 %v736
    %v828 = vunpack.c.l.b16 %v737
    %v829 = vunpack.c.h.b16 %v737
    %v830 = vunpack.c.l.b16 %v738
    %v831 = vunpack.c.h.b16 %v738
    %v832 = vunpack.c.l.b16 %v739
    %v833 = vunpack.c.h.b16 %v739
    %v834 = vunpack.c.l.b16 %v740
    %v835 = vunpack.c.h.b16 %v740
    %v836 = vunpack.c.l.b16 %v741
    %v837 = vunpack.c.h.b16 %v741
    %v838 = vpack.c.b16 %v776, %v774
    %v839 = vpack.c.b16 %v777, %v775
    %v840 = vpack.c.b16 %v780, %v778
    %v841 = vpack.c.b16 %v781, %v779
    %v842 = vpack.c.b16 %v784, %v782
    %v843 = vpack.c.b16 %v785, %v783
    %v844 = vpack.c.b16 %v788, %v786
    %v845 = vpack.c.b16 %v789, %v787
    %v846 = vpack.c.b16 %v792, %v790
    %v847 = vpack.c.b16 %v793, %v791
    %v848 = vpack.c.b16 %v796, %v794
    %v849 = vpack.c.b16 %v797, %v795
    %v850 = vpack.c.b16 %v800, %v798
    %v851 = vpack.c.b16 %v801, %v799
    %v852 = vpack.c.b16 %v804, %v802
    %v853 = vpack.c.b16 %v805, %v803
    %v854 = vpack.c.b16 %v808, %v806
    %v855 = vpack.c.b16 %v809, %v807
    %v856 = vpack.c.b16 %v812, %v810
    %v857 = vpack.c.b16 %v813, %v811
    %v858 = vpack.c.b16 %v816, %v814
    %v859 = vpack.c.b16 %v817, %v815
    %v860 = vpack.c.b16 %v820, %v818
    %v861 = vpack.c.b16 %v821, %v819
    %v862 = vpack.c.b16 %v824, %v822
    %v863 = vpack.c.b16 %v825, %v823
    %v864 = vpack.c.b16 %v828, %v826
    %v865 = vpack.c.b16 %v829, %v827
    %v866 = vpack.c.b16 %v832, %v830
    %v867 = vpack.c.b16 %v833, %v831
    %v868 = vpack.c.b16 %v836, %v834
    %v869 = vpack.c.b16 %v837, %v835
    %vm886 = vcmask 916480
    %v888 = vsel %vm886, %v839, 0
    %v891 = vsel %vm886, %v841, 0
    %v894 = vsel %vm886, %v843, 0
    %v897 = vsel %vm886, %v845, 0
    %v900 = vsel %vm886, %v847, 0
    %v903 = vsel %vm886, %v849, 0
    %v906 = vsel %vm886, %v851, 0
    %v909 = vsel %vm886, %v853, 0
    %v912 = vsel %vm886, %v855, 0
    %v915 = vsel %vm886, %v857, 0
    %v918 = vsel %vm886, %v859, 0
    %v921 = vsel %vm886, %v861, 0
    %v924 = vsel %vm886, %v863, 0
    %v927 = vsel %vm886, %v865, 0
    %v930 = vsel %vm886, %v867, 0
    %v933 = vsel %vm886, %v869, 0
    %935 = vmatpush.bf16.msra.mxu0 %v670
    %936 = vmatpush.bf16.msra.mxu0 %v669
    %937 = vmatpush.bf16.msra.mxu0 %v668
    %938 = vmatpush.bf16.msra.mxu0 %v667
    %939 = vmatpush.bf16.msra.mxu0 %v666
    %940 = vmatpush.bf16.msra.mxu0 %v665
    %941 = vmatpush.bf16.msra.mxu0 %v664
    %942 = vmatpush.bf16.msra.mxu0 %v663
    %943 = vmatmul.bf16.gmra.mxu0 %v838
    %v944 = vpop.f32.mrf.mxu0
    %v945 = vadd.f32 0.0, %v944
    %v946 = vpop.f32.mrf.mxu0
    %v947 = vadd.f32 0.0, %v946
    %948 = vmatmul.bf16.gmra.mxu0 %v840
    %v949 = vpop.f32.mrf.mxu0
    %v950 = vadd.f32 0.0, %v949
    %v951 = vpop.f32.mrf.mxu0
    %v952 = vadd.f32 0.0, %v951
    %953 = vmatmul.bf16.gmra.mxu0 %v842
    %v954 = vpop.f32.mrf.mxu0
    %v955 = vadd.f32 0.0, %v954
    %v956 = vpop.f32.mrf.mxu0
    %v957 = vadd.f32 0.0, %v956
    %958 = vmatmul.bf16.gmra.mxu0 %v844
    %v959 = vpop.f32.mrf.mxu0
    %v960 = vadd.f32 0.0, %v959
    %v961 = vpop.f32.mrf.mxu0
    %v962 = vadd.f32 0.0, %v961
    %963 = vmatmul.bf16.gmra.mxu0 %v846
    %v964 = vpop.f32.mrf.mxu0
    %v965 = vadd.f32 0.0, %v964
    %v966 = vpop.f32.mrf.mxu0
    %v967 = vadd.f32 0.0, %v966
    %968 = vmatmul.bf16.gmra.mxu0 %v848
    %v969 = vpop.f32.mrf.mxu0
    %v970 = vadd.f32 0.0, %v969
    %v971 = vpop.f32.mrf.mxu0
    %v972 = vadd.f32 0.0, %v971
    %973 = vmatmul.bf16.gmra.mxu0 %v850
    %v974 = vpop.f32.mrf.mxu0
    %v975 = vadd.f32 0.0, %v974
    %v976 = vpop.f32.mrf.mxu0
    %v977 = vadd.f32 0.0, %v976
    %978 = vmatmul.bf16.gmra.mxu0 %v852
    %v979 = vpop.f32.mrf.mxu0
    %v980 = vadd.f32 0.0, %v979
    %v981 = vpop.f32.mrf.mxu0
    %v982 = vadd.f32 0.0, %v981
    %983 = vmatmul.bf16.gmra.mxu0 %v854
    %v984 = vpop.f32.mrf.mxu0
    %v985 = vadd.f32 0.0, %v984
    %v986 = vpop.f32.mrf.mxu0
    %v987 = vadd.f32 0.0, %v986
    %988 = vmatmul.bf16.gmra.mxu0 %v856
    %v989 = vpop.f32.mrf.mxu0
    %v990 = vadd.f32 0.0, %v989
    %v991 = vpop.f32.mrf.mxu0
    %v992 = vadd.f32 0.0, %v991
    %993 = vmatmul.bf16.gmra.mxu0 %v858
    %v994 = vpop.f32.mrf.mxu0
    %v995 = vadd.f32 0.0, %v994
    %v996 = vpop.f32.mrf.mxu0
    %v997 = vadd.f32 0.0, %v996
    %998 = vmatmul.bf16.gmra.mxu0 %v860
    %v999 = vpop.f32.mrf.mxu0
    %v1000 = vadd.f32 0.0, %v999
    %v1001 = vpop.f32.mrf.mxu0
    %v1002 = vadd.f32 0.0, %v1001
    %1003 = vmatmul.bf16.gmra.mxu0 %v862
    %v1004 = vpop.f32.mrf.mxu0
    %v1005 = vadd.f32 0.0, %v1004
    %v1006 = vpop.f32.mrf.mxu0
    %v1007 = vadd.f32 0.0, %v1006
    %1008 = vmatmul.bf16.gmra.mxu0 %v864
    %v1009 = vpop.f32.mrf.mxu0
    %v1010 = vadd.f32 0.0, %v1009
    %v1011 = vpop.f32.mrf.mxu0
    %v1012 = vadd.f32 0.0, %v1011
    %1013 = vmatmul.bf16.gmra.mxu0 %v866
    %v1014 = vpop.f32.mrf.mxu0
    %v1015 = vadd.f32 0.0, %v1014
    %v1016 = vpop.f32.mrf.mxu0
    %v1017 = vadd.f32 0.0, %v1016
    %1018 = vmatmul.bf16.gmra.mxu0 %v868
    %v1019 = vpop.f32.mrf.mxu0
    %v1020 = vadd.f32 0.0, %v1019
    %v1021 = vpop.f32.mrf.mxu0
    %v1022 = vadd.f32 0.0, %v1021
    %1023 = vdwg.mxu0
    %1024 = vmatpush.bf16.msra.mxu0 0
    %1025 = vmatpush.bf16.msra.mxu0 %v677
    %1026 = vmatpush.bf16.msra.mxu0 %v676
    %1027 = vmatpush.bf16.msra.mxu0 %v675
    %1028 = vmatpush.bf16.msra.mxu0 %v674
    %1029 = vmatpush.bf16.msra.mxu0 %v673
    %1030 = vmatpush.bf16.msra.mxu0 %v672
    %1031 = vmatpush.bf16.msra.mxu0 %v671
    %1032 = vmatmul.bf16.gmra.mxu0 %v888
    %v1033 = vpop.f32.mrf.mxu0
    %v1034 = vadd.f32 %v945, %v1033
    %v1035 = vpop.f32.mrf.mxu0
    %v1036 = vadd.f32 %v947, %v1035
    %1037 = vmatmul.bf16.gmra.mxu0 %v891
    %v1038 = vpop.f32.mrf.mxu0
    %v1039 = vadd.f32 %v950, %v1038
    %v1040 = vpop.f32.mrf.mxu0
    %v1041 = vadd.f32 %v952, %v1040
    %1042 = vmatmul.bf16.gmra.mxu0 %v894
    %v1043 = vpop.f32.mrf.mxu0
    %v1044 = vadd.f32 %v955, %v1043
    %v1045 = vpop.f32.mrf.mxu0
    %v1046 = vadd.f32 %v957, %v1045
    %1047 = vmatmul.bf16.gmra.mxu0 %v897
    %v1048 = vpop.f32.mrf.mxu0
    %v1049 = vadd.f32 %v960, %v1048
    %v1050 = vpop.f32.mrf.mxu0
    %v1051 = vadd.f32 %v962, %v1050
    %1052 = vmatmul.bf16.gmra.mxu0 %v900
    %v1053 = vpop.f32.mrf.mxu0
    %v1054 = vadd.f32 %v965, %v1053
    %v1055 = vpop.f32.mrf.mxu0
    %v1056 = vadd.f32 %v967, %v1055
    %1057 = vmatmul.bf16.gmra.mxu0 %v903
    %v1058 = vpop.f32.mrf.mxu0
    %v1059 = vadd.f32 %v970, %v1058
    %v1060 = vpop.f32.mrf.mxu0
    %v1061 = vadd.f32 %v972, %v1060
    %1062 = vmatmul.bf16.gmra.mxu0 %v906
    %v1063 = vpop.f32.mrf.mxu0
    %v1064 = vadd.f32 %v975, %v1063
    %v1065 = vpop.f32.mrf.mxu0
    %v1066 = vadd.f32 %v977, %v1065
    %1067 = vmatmul.bf16.gmra.mxu0 %v909
    %v1068 = vpop.f32.mrf.mxu0
    %v1069 = vadd.f32 %v980, %v1068
    %v1070 = vpop.f32.mrf.mxu0
    %v1071 = vadd.f32 %v982, %v1070
    %1072 = vmatmul.bf16.gmra.mxu0 %v912
    %v1073 = vpop.f32.mrf.mxu0
    %v1074 = vadd.f32 %v985, %v1073
    %v1075 = vpop.f32.mrf.mxu0
    %v1076 = vadd.f32 %v987, %v1075
    %1077 = vmatmul.bf16.gmra.mxu0 %v915
    %v1078 = vpop.f32.mrf.mxu0
    %v1079 = vadd.f32 %v990, %v1078
    %v1080 = vpop.f32.mrf.mxu0
    %v1081 = vadd.f32 %v992, %v1080
    %1082 = vmatmul.bf16.gmra.mxu0 %v918
    %v1083 = vpop.f32.mrf.mxu0
    %v1084 = vadd.f32 %v995, %v1083
    %v1085 = vpop.f32.mrf.mxu0
    %v1086 = vadd.f32 %v997, %v1085
    %1087 = vmatmul.bf16.gmra.mxu0 %v921
    %v1088 = vpop.f32.mrf.mxu0
    %v1089 = vadd.f32 %v1000, %v1088
    %v1090 = vpop.f32.mrf.mxu0
    %v1091 = vadd.f32 %v1002, %v1090
    %1092 = vmatmul.bf16.gmra.mxu0 %v924
    %v1093 = vpop.f32.mrf.mxu0
    %v1094 = vadd.f32 %v1005, %v1093
    %v1095 = vpop.f32.mrf.mxu0
    %v1096 = vadd.f32 %v1007, %v1095
    %1097 = vmatmul.bf16.gmra.mxu0 %v927
    %v1098 = vpop.f32.mrf.mxu0
    %v1099 = vadd.f32 %v1010, %v1098
    %v1100 = vpop.f32.mrf.mxu0
    %v1101 = vadd.f32 %v1012, %v1100
    %1102 = vmatmul.bf16.gmra.mxu0 %v930
    %v1103 = vpop.f32.mrf.mxu0
    %v1104 = vadd.f32 %v1015, %v1103
    %v1105 = vpop.f32.mrf.mxu0
    %v1106 = vadd.f32 %v1017, %v1105
    %1107 = vmatmul.bf16.gmra.mxu0 %v933
    %v1108 = vpop.f32.mrf.mxu0
    %v1109 = vadd.f32 %v1020, %v1108
    %v1110 = vpop.f32.mrf.mxu0
    %v1111 = vadd.f32 %v1022, %v1110
    %1112 = vdwg.mxu0
    %v1145 = vunpack.c.l.b16 %v678
    %v1146 = vunpack.c.l.b16 %v679
    %v1147 = vunpack.c.l.b16 %v680
    %v1148 = vunpack.c.l.b16 %v681
    %v1149 = vunpack.c.l.b16 %v682
    %v1150 = vunpack.c.l.b16 %v683
    %v1151 = vunpack.c.l.b16 %v684
    %v1152 = vunpack.c.l.b16 %v685
    %v1153 = vunpack.c.l.b16 %v686
    %v1154 = vunpack.c.l.b16 %v687
    %v1155 = vunpack.c.l.b16 %v688
    %v1156 = vunpack.c.l.b16 %v689
    %v1157 = vunpack.c.l.b16 %v690
    %v1158 = vunpack.c.l.b16 %v691
    %v1159 = vunpack.c.l.b16 %v692
    %v1160 = vunpack.c.l.b16 %v693
    %v1161 = vunpack.c.l.b16 %v694
    %v1162 = vunpack.c.l.b16 %v695
    %v1163 = vunpack.c.l.b16 %v696
    %v1164 = vunpack.c.l.b16 %v697
    %v1165 = vunpack.c.l.b16 %v698
    %v1166 = vunpack.c.l.b16 %v699
    %v1167 = vunpack.c.l.b16 %v700
    %v1168 = vunpack.c.l.b16 %v701
    %v1169 = vunpack.c.l.b16 %v702
    %v1170 = vunpack.c.l.b16 %v703
    %v1171 = vunpack.c.l.b16 %v704
    %v1172 = vunpack.c.l.b16 %v705
    %v1173 = vunpack.c.l.b16 %v706
    %v1174 = vunpack.c.l.b16 %v707
    %v1175 = vunpack.c.l.b16 %v708
    %v1176 = vunpack.c.l.b16 %v709
    %v1177 = vpack.c.b16 %v1146, %v1145
    %v1178 = vpack.c.b16 %v1148, %v1147
    %v1179 = vpack.c.b16 %v1150, %v1149
    %v1180 = vpack.c.b16 %v1152, %v1151
    %v1181 = vpack.c.b16 %v1154, %v1153
    %v1182 = vpack.c.b16 %v1156, %v1155
    %v1183 = vpack.c.b16 %v1158, %v1157
    %v1184 = vpack.c.b16 %v1160, %v1159
    %v1185 = vpack.c.b16 %v1162, %v1161
    %v1186 = vpack.c.b16 %v1164, %v1163
    %v1187 = vpack.c.b16 %v1166, %v1165
    %v1188 = vpack.c.b16 %v1168, %v1167
    %v1189 = vpack.c.b16 %v1170, %v1169
    %v1190 = vpack.c.b16 %v1172, %v1171
    %v1191 = vpack.c.b16 %v1174, %v1173
    %v1192 = vpack.c.b16 %v1176, %v1175
    %v1202 = vunpack.c.l.b16 %v110
    %v1203 = vunpack.c.l.b16 %v111
    %v1204 = vunpack.c.l.b16 %v112
    %v1205 = vunpack.c.l.b16 %v113
    %v1206 = vunpack.c.l.b16 %v114
    %v1207 = vunpack.c.l.b16 %v115
    %v1208 = vunpack.c.l.b16 %v116
    %v1209 = vunpack.c.l.b16 %v117
    %v1210 = vunpack.c.l.b16 %v118
    %v1211 = vpack.c.b16 %v1203, %v1202
    %v1212 = vpack.c.b16 %v1205, %v1204
    %v1213 = vpack.c.b16 %v1207, %v1206
    %v1214 = vpack.c.b16 %v1209, %v1208
    %v1215 = vpack.c.b16 %v1210, %v1210
    %vm1220 = vcmask 547840
    %v1222 = vsel %vm1220, %v1177, 0
    %v1225 = vsel %vm1220, %v1178, 0
    %v1228 = vsel %vm1220, %v1179, 0
    %v1231 = vsel %vm1220, %v1180, 0
    %v1234 = vsel %vm1220, %v1181, 0
    %v1237 = vsel %vm1220, %v1182, 0
    %v1240 = vsel %vm1220, %v1183, 0
    %v1243 = vsel %vm1220, %v1184, 0
    %v1246 = vsel %vm1220, %v1185, 0
    %v1249 = vsel %vm1220, %v1186, 0
    %v1252 = vsel %vm1220, %v1187, 0
    %v1255 = vsel %vm1220, %v1188, 0
    %v1258 = vsel %vm1220, %v1189, 0
    %v1261 = vsel %vm1220, %v1190, 0
    %v1264 = vsel %vm1220, %v1191, 0
    %v1267 = vsel %vm1220, %v1192, 0
    %vm1269 = vcmask 1040384
    %vm1270 = vcmask 1041408
    %v1271 = vsel %vm1269, 4294967295, 65535
    %v1272 = vsel %vm1270, %v1271, 0
    %v1274 = vand.u32 %v1215, %v1272
    %1276 = vmatpush.bf16.msra.mxu0 0
    %1277 = vmatpush.bf16.msra.mxu0 0
    %1278 = vmatpush.bf16.msra.mxu0 0
    %1279 = vmatpush.bf16.msra.mxu0 %v1274
    %1280 = vmatpush.bf16.msra.mxu0 %v1214
    %1281 = vmatpush.bf16.msra.mxu0 %v1213
    %1282 = vmatpush.bf16.msra.mxu0 %v1212
    %1283 = vmatpush.bf16.msra.mxu0 %v1211
    %1284 = vmatmul.bf16.gmra.mxu0 %v1222
    %v1285 = vpop.f32.mrf.mxu0
    %v1286 = vadd.f32 %v1034, %v1285
    %v1287 = vpop.f32.mrf.mxu0
    %v1288 = vadd.f32 %v1036, %v1287
    %1289 = vmatmul.bf16.gmra.mxu0 %v1225
    %v1290 = vpop.f32.mrf.mxu0
    %v1291 = vadd.f32 %v1039, %v1290
    %v1292 = vpop.f32.mrf.mxu0
    %v1293 = vadd.f32 %v1041, %v1292
    %1294 = vmatmul.bf16.gmra.mxu0 %v1228
    %v1295 = vpop.f32.mrf.mxu0
    %v1296 = vadd.f32 %v1044, %v1295
    %v1297 = vpop.f32.mrf.mxu0
    %v1298 = vadd.f32 %v1046, %v1297
    %1299 = vmatmul.bf16.gmra.mxu0 %v1231
    %v1300 = vpop.f32.mrf.mxu0
    %v1301 = vadd.f32 %v1049, %v1300
    %v1302 = vpop.f32.mrf.mxu0
    %v1303 = vadd.f32 %v1051, %v1302
    %1304 = vmatmul.bf16.gmra.mxu0 %v1234
    %v1305 = vpop.f32.mrf.mxu0
    %v1306 = vadd.f32 %v1054, %v1305
    %v1307 = vpop.f32.mrf.mxu0
    %v1308 = vadd.f32 %v1056, %v1307
    %1309 = vmatmul.bf16.gmra.mxu0 %v1237
    %v1310 = vpop.f32.mrf.mxu0
    %v1311 = vadd.f32 %v1059, %v1310
    %v1312 = vpop.f32.mrf.mxu0
    %v1313 = vadd.f32 %v1061, %v1312
    %1314 = vmatmul.bf16.gmra.mxu0 %v1240
    %v1315 = vpop.f32.mrf.mxu0
    %v1316 = vadd.f32 %v1064, %v1315
    %v1317 = vpop.f32.mrf.mxu0
    %v1318 = vadd.f32 %v1066, %v1317
    %1319 = vmatmul.bf16.gmra.mxu0 %v1243
    %v1320 = vpop.f32.mrf.mxu0
    %v1321 = vadd.f32 %v1069, %v1320
    %v1322 = vpop.f32.mrf.mxu0
    %v1323 = vadd.f32 %v1071, %v1322
    %1324 = vmatmul.bf16.gmra.mxu0 %v1246
    %v1325 = vpop.f32.mrf.mxu0
    %v1326 = vadd.f32 %v1074, %v1325
    %v1327 = vpop.f32.mrf.mxu0
    %v1328 = vadd.f32 %v1076, %v1327
    %1329 = vmatmul.bf16.gmra.mxu0 %v1249
    %v1330 = vpop.f32.mrf.mxu0
    %v1331 = vadd.f32 %v1079, %v1330
    %v1332 = vpop.f32.mrf.mxu0
    %v1333 = vadd.f32 %v1081, %v1332
    %1334 = vmatmul.bf16.gmra.mxu0 %v1252
    %v1335 = vpop.f32.mrf.mxu0
    %v1336 = vadd.f32 %v1084, %v1335
    %v1337 = vpop.f32.mrf.mxu0
    %v1338 = vadd.f32 %v1086, %v1337
    %1339 = vmatmul.bf16.gmra.mxu0 %v1255
    %v1340 = vpop.f32.mrf.mxu0
    %v1341 = vadd.f32 %v1089, %v1340
    %v1342 = vpop.f32.mrf.mxu0
    %v1343 = vadd.f32 %v1091, %v1342
    %1344 = vmatmul.bf16.gmra.mxu0 %v1258
    %v1345 = vpop.f32.mrf.mxu0
    %v1346 = vadd.f32 %v1094, %v1345
    %v1347 = vpop.f32.mrf.mxu0
    %v1348 = vadd.f32 %v1096, %v1347
    %1349 = vmatmul.bf16.gmra.mxu0 %v1261
    %v1350 = vpop.f32.mrf.mxu0
    %v1351 = vadd.f32 %v1099, %v1350
    %v1352 = vpop.f32.mrf.mxu0
    %v1353 = vadd.f32 %v1101, %v1352
    %1354 = vmatmul.bf16.gmra.mxu0 %v1264
    %v1355 = vpop.f32.mrf.mxu0
    %v1356 = vadd.f32 %v1104, %v1355
    %v1357 = vpop.f32.mrf.mxu0
    %v1358 = vadd.f32 %v1106, %v1357
    %1359 = vmatmul.bf16.gmra.mxu0 %v1267
    %v1360 = vpop.f32.mrf.mxu0
    %v1361 = vadd.f32 %v1109, %v1360
    %v1362 = vpop.f32.mrf.mxu0
    %v1363 = vadd.f32 %v1111, %v1362
    %1364 = vdwg.mxu0
    %v1365 = vld [vmem:[%s12] sm:$0xff]
    %v1366 = vld [vmem:[%s12 + $0x8] sm:$0xff]
    %v1367 = vld [vmem:[%s12 + $0x10] sm:$0xff]
    %v1368 = vld [vmem:[%s12 + $0x18] sm:$0xff]
    %v1369 = vld [vmem:[%s12 + $0x20] sm:$0xff]
    %v1370 = vld [vmem:[%s12 + $0x28] sm:$0xff]
    %v1371 = vld [vmem:[%s12 + $0x30] sm:$0xff]
    %v1372 = vld [vmem:[%s12 + $0x38] sm:$0xff]
    %v1373 = vld [vmem:[%s12 + $0x40] sm:$0xff]
    %v1374 = vld [vmem:[%s12 + $0x48] sm:$0xff]
    %v1375 = vld [vmem:[%s12 + $0x50] sm:$0xff]
    %v1376 = vld [vmem:[%s12 + $0x58] sm:$0xff]
    %v1377 = vld [vmem:[%s12 + $0x60] sm:$0xff]
    %v1378 = vld [vmem:[%s12 + $0x68] sm:$0xff]
    %v1379 = vld [vmem:[%s12 + $0x70] sm:$0xff]
    %v1380 = vld [vmem:[%s12 + $0x78] sm:$0xff]
    %v1381 = vld [vmem:[%s12 + $0x80] sm:$0xff]
    %v1382 = vld [vmem:[%s12 + $0x88] sm:$0xff]
    %v1383 = vld [vmem:[%s12 + $0x90] sm:$0xff]
    %v1384 = vld [vmem:[%s12 + $0x98] sm:$0xff]
    %v1385 = vld [vmem:[%s12 + $0xa0] sm:$0xff]
    %v1386 = vld [vmem:[%s12 + $0xa8] sm:$0xff]
    %v1387 = vld [vmem:[%s12 + $0xb0] sm:$0xff]
    %v1388 = vld [vmem:[%s12 + $0xb8] sm:$0xff]
    %v1389 = vld [vmem:[%s12 + $0xc0] sm:$0xff]
    %v1390 = vld [vmem:[%s12 + $0xc8] sm:$0xff]
    %v1391 = vld [vmem:[%s12 + $0xd0] sm:$0xff]
    %v1392 = vld [vmem:[%s12 + $0xd8] sm:$0xff]
    %v1393 = vld [vmem:[%s12 + $0xe0] sm:$0xff]
    %v1394 = vld [vmem:[%s12 + $0xe8] sm:$0xff]
    %v1395 = vld [vmem:[%s12 + $0xf0] sm:$0xff]
    %v1396 = vld [vmem:[%s12 + $0xf8] sm:$0xff]
    %1398 = vset.pattern.permute.xlu0 0
    %1399 = vperm.xlu0 %1398, %v1365
    %v1400 = vpop.permute.xlu0 %1399
    %1403 = vset.pattern.permute.xlu0 0
    %1404 = vperm.xlu0 %1403, %v1366
    %v1405 = vpop.permute.xlu0 %1404
    %1408 = vset.pattern.permute.xlu0 0
    %1409 = vperm.xlu0 %1408, %v1367
    %v1410 = vpop.permute.xlu0 %1409
    %1413 = vset.pattern.permute.xlu0 0
    %1414 = vperm.xlu0 %1413, %v1368
    %v1415 = vpop.permute.xlu0 %1414
    %1418 = vset.pattern.permute.xlu0 0
    %1419 = vperm.xlu0 %1418, %v1369
    %v1420 = vpop.permute.xlu0 %1419
    %1423 = vset.pattern.permute.xlu0 0
    %1424 = vperm.xlu0 %1423, %v1370
    %v1425 = vpop.permute.xlu0 %1424
    %1428 = vset.pattern.permute.xlu0 0
    %1429 = vperm.xlu0 %1428, %v1371
    %v1430 = vpop.permute.xlu0 %1429
    %1433 = vset.pattern.permute.xlu0 0
    %1434 = vperm.xlu0 %1433, %v1372
    %v1435 = vpop.permute.xlu0 %1434
    %1438 = vset.pattern.permute.xlu0 0
    %1439 = vperm.xlu0 %1438, %v1373
    %v1440 = vpop.permute.xlu0 %1439
    %1443 = vset.pattern.permute.xlu0 0
    %1444 = vperm.xlu0 %1443, %v1374
    %v1445 = vpop.permute.xlu0 %1444
    %1448 = vset.pattern.permute.xlu0 0
    %1449 = vperm.xlu0 %1448, %v1375
    %v1450 = vpop.permute.xlu0 %1449
    %1453 = vset.pattern.permute.xlu0 0
    %1454 = vperm.xlu0 %1453, %v1376
    %v1455 = vpop.permute.xlu0 %1454
    %1458 = vset.pattern.permute.xlu0 0
    %1459 = vperm.xlu0 %1458, %v1377
    %v1460 = vpop.permute.xlu0 %1459
    %1463 = vset.pattern.permute.xlu0 0
    %1464 = vperm.xlu0 %1463, %v1378
    %v1465 = vpop.permute.xlu0 %1464
    %1468 = vset.pattern.permute.xlu0 0
    %1469 = vperm.xlu0 %1468, %v1379
    %v1470 = vpop.permute.xlu0 %1469
    %1473 = vset.pattern.permute.xlu0 0
    %1474 = vperm.xlu0 %1473, %v1380
    %v1475 = vpop.permute.xlu0 %1474
    %1478 = vset.pattern.permute.xlu0 0
    %1479 = vperm.xlu0 %1478, %v1381
    %v1480 = vpop.permute.xlu0 %1479
    %1483 = vset.pattern.permute.xlu0 0
    %1484 = vperm.xlu0 %1483, %v1382
    %v1485 = vpop.permute.xlu0 %1484
    %1488 = vset.pattern.permute.xlu0 0
    %1489 = vperm.xlu0 %1488, %v1383
    %v1490 = vpop.permute.xlu0 %1489
    %1493 = vset.pattern.permute.xlu0 0
    %1494 = vperm.xlu0 %1493, %v1384
    %v1495 = vpop.permute.xlu0 %1494
    %1498 = vset.pattern.permute.xlu0 0
    %1499 = vperm.xlu0 %1498, %v1385
    %v1500 = vpop.permute.xlu0 %1499
    %1503 = vset.pattern.permute.xlu0 0
    %1504 = vperm.xlu0 %1503, %v1386
    %v1505 = vpop.permute.xlu0 %1504
    %1508 = vset.pattern.permute.xlu0 0
    %1509 = vperm.xlu0 %1508, %v1387
    %v1510 = vpop.permute.xlu0 %1509
    %1513 = vset.pattern.permute.xlu0 0
    %1514 = vperm.xlu0 %1513, %v1388
    %v1515 = vpop.permute.xlu0 %1514
    %1518 = vset.pattern.permute.xlu0 0
    %1519 = vperm.xlu0 %1518, %v1389
    %v1520 = vpop.permute.xlu0 %1519
    %1523 = vset.pattern.permute.xlu0 0
    %1524 = vperm.xlu0 %1523, %v1390
    %v1525 = vpop.permute.xlu0 %1524
    %1528 = vset.pattern.permute.xlu0 0
    %1529 = vperm.xlu0 %1528, %v1391
    %v1530 = vpop.permute.xlu0 %1529
    %1533 = vset.pattern.permute.xlu0 0
    %1534 = vperm.xlu0 %1533, %v1392
    %v1535 = vpop.permute.xlu0 %1534
    %1538 = vset.pattern.permute.xlu0 0
    %1539 = vperm.xlu0 %1538, %v1393
    %v1540 = vpop.permute.xlu0 %1539
    %1543 = vset.pattern.permute.xlu0 0
    %1544 = vperm.xlu0 %1543, %v1394
    %v1545 = vpop.permute.xlu0 %1544
    %1548 = vset.pattern.permute.xlu0 0
    %1549 = vperm.xlu0 %1548, %v1395
    %v1550 = vpop.permute.xlu0 %1549
    %1553 = vset.pattern.permute.xlu0 0
    %1554 = vperm.xlu0 %1553, %v1396
    %v1555 = vpop.permute.xlu0 %1554
    %v1557 = vadd.f32 %v1286, %v1400
    %v1558 = vadd.f32 %v1288, %v1405
    %v1559 = vadd.f32 %v1291, %v1410
    %v1560 = vadd.f32 %v1293, %v1415
    %v1561 = vadd.f32 %v1296, %v1420
    %v1562 = vadd.f32 %v1298, %v1425
    %v1563 = vadd.f32 %v1301, %v1430
    %v1564 = vadd.f32 %v1303, %v1435
    %v1565 = vadd.f32 %v1306, %v1440
    %v1566 = vadd.f32 %v1308, %v1445
    %v1567 = vadd.f32 %v1311, %v1450
    %v1568 = vadd.f32 %v1313, %v1455
    %v1569 = vadd.f32 %v1316, %v1460
    %v1570 = vadd.f32 %v1318, %v1465
    %v1571 = vadd.f32 %v1321, %v1470
    %v1572 = vadd.f32 %v1323, %v1475
    %v1573 = vadd.f32 %v1326, %v1480
    %v1574 = vadd.f32 %v1328, %v1485
    %v1575 = vadd.f32 %v1331, %v1490
    %v1576 = vadd.f32 %v1333, %v1495
    %v1577 = vadd.f32 %v1336, %v1500
    %v1578 = vadd.f32 %v1338, %v1505
    %v1579 = vadd.f32 %v1341, %v1510
    %v1580 = vadd.f32 %v1343, %v1515
    %v1581 = vadd.f32 %v1346, %v1520
    %v1582 = vadd.f32 %v1348, %v1525
    %v1583 = vadd.f32 %v1351, %v1530
    %v1584 = vadd.f32 %v1353, %v1535
    %v1585 = vadd.f32 %v1356, %v1540
    %v1586 = vadd.f32 %v1358, %v1545
    %v1587 = vadd.f32 %v1361, %v1550
    %v1588 = vadd.f32 %v1363, %v1555
    %v1589 = vmax.f32 %v1557, 0.0
    %v1590 = vmax.f32 %v1558, 0.0
    %v1591 = vmax.f32 %v1559, 0.0
    %v1592 = vmax.f32 %v1560, 0.0
    %v1593 = vmax.f32 %v1561, 0.0
    %v1594 = vmax.f32 %v1562, 0.0
    %v1595 = vmax.f32 %v1563, 0.0
    %v1596 = vmax.f32 %v1564, 0.0
    %v1597 = vmax.f32 %v1565, 0.0
    %v1598 = vmax.f32 %v1566, 0.0
    %v1599 = vmax.f32 %v1567, 0.0
    %v1600 = vmax.f32 %v1568, 0.0
    %v1601 = vmax.f32 %v1569, 0.0
    %v1602 = vmax.f32 %v1570, 0.0
    %v1603 = vmax.f32 %v1571, 0.0
    %v1604 = vmax.f32 %v1572, 0.0
    %v1605 = vmax.f32 %v1573, 0.0
    %v1606 = vmax.f32 %v1574, 0.0
    %v1607 = vmax.f32 %v1575, 0.0
    %v1608 = vmax.f32 %v1576, 0.0
    %v1609 = vmax.f32 %v1577, 0.0
    %v1610 = vmax.f32 %v1578, 0.0
    %v1611 = vmax.f32 %v1579, 0.0
    %v1612 = vmax.f32 %v1580, 0.0
    %v1613 = vmax.f32 %v1581, 0.0
    %v1614 = vmax.f32 %v1582, 0.0
    %v1615 = vmax.f32 %v1583, 0.0
    %v1616 = vmax.f32 %v1584, 0.0
    %v1617 = vmax.f32 %v1585, 0.0
    %v1618 = vmax.f32 %v1586, 0.0
    %v1619 = vmax.f32 %v1587, 0.0
    %v1620 = vmax.f32 %v1588, 0.0
    %v1621 = vld [vmem:[#allocation7] sm:$0xff]
    %v1622 = vld [vmem:[#allocation7 + $0x8] sm:$0xff]
    %v1623 = vld [vmem:[#allocation7 + $0x10] sm:$0xff]
    %v1624 = vld [vmem:[#allocation7 + $0x18] sm:$0xff]
    %v1625 = vld [vmem:[#allocation7 + $0x20] sm:$0xff]
    %v1626 = vld [vmem:[#allocation7 + $0x28] sm:$0xff]
    %v1627 = vld [vmem:[#allocation7 + $0x30] sm:$0xff]
    %v1628 = vld [vmem:[#allocation7 + $0x38] sm:$0xff]
    %v1629 = vld [vmem:[#allocation7 + $0x40] sm:$0xff]
    %v1630 = vld [vmem:[#allocation7 + $0x48] sm:$0xff]
    %v1631 = vld [vmem:[#allocation7 + $0x50] sm:$0xff]
    %v1632 = vld [vmem:[#allocation7 + $0x58] sm:$0xff]
    %v1633 = vld [vmem:[#allocation7 + $0x60] sm:$0xff]
    %v1634 = vld [vmem:[#allocation7 + $0x68] sm:$0xff]
    %v1635 = vld [vmem:[#allocation7 + $0x70] sm:$0xff]
    %v1636 = vld [vmem:[#allocation7 + $0x78] sm:$0xff]
    %v1637 = vpack.c.bf16 %v1590, %v1589
    %v1638 = vpack.c.bf16 %v1592, %v1591
    %v1639 = vpack.c.bf16 %v1594, %v1593
    %v1640 = vpack.c.bf16 %v1596, %v1595
    %v1641 = vpack.c.bf16 %v1598, %v1597
    %v1642 = vpack.c.bf16 %v1600, %v1599
    %v1643 = vpack.c.bf16 %v1602, %v1601
    %v1644 = vpack.c.bf16 %v1604, %v1603
    %v1645 = vpack.c.bf16 %v1606, %v1605
    %v1646 = vpack.c.bf16 %v1608, %v1607
    %v1647 = vpack.c.bf16 %v1610, %v1609
    %v1648 = vpack.c.bf16 %v1612, %v1611
    %v1649 = vpack.c.bf16 %v1614, %v1613
    %v1650 = vpack.c.bf16 %v1616, %v1615
    %v1651 = vpack.c.bf16 %v1618, %v1617
    %v1652 = vpack.c.bf16 %v1620, %v1619
    %v1653 = vld [vmem:[%s12 + $0x100] sm:$0xff]
    %v1654 = vld [vmem:[%s12 + $0x108] sm:$0xff]
    %v1655 = vld [vmem:[%s12 + $0x110] sm:$0xff]
    %v1656 = vld [vmem:[%s12 + $0x118] sm:$0xff]
    %v1657 = vld [vmem:[%s12 + $0x120] sm:$0xff]
    %v1658 = vld [vmem:[%s12 + $0x128] sm:$0xff]
    %v1659 = vld [vmem:[%s12 + $0x130] sm:$0xff]
    %v1660 = vld [vmem:[%s12 + $0x138] sm:$0xff]
    %v1661 = vld [vmem:[%s12 + $0x140] sm:$0xff]
    %v1662 = vld [vmem:[%s12 + $0x148] sm:$0xff]
    %v1663 = vld [vmem:[%s12 + $0x150] sm:$0xff]
    %v1664 = vld [vmem:[%s12 + $0x158] sm:$0xff]
    %v1665 = vld [vmem:[%s12 + $0x160] sm:$0xff]
    %v1666 = vld [vmem:[%s12 + $0x168] sm:$0xff]
    %v1667 = vld [vmem:[%s12 + $0x170] sm:$0xff]
    %v1668 = vld [vmem:[%s12 + $0x178] sm:$0xff]
    %1670 = vset.pattern.permute.xlu0 0
    %1671 = vperm.xlu0 %1670, %v1653
    %v1672 = vpop.permute.xlu0 %1671
    %1675 = vset.pattern.permute.xlu0 0
    %1676 = vperm.xlu0 %1675, %v1654
    %v1677 = vpop.permute.xlu0 %1676
    %1680 = vset.pattern.permute.xlu0 0
    %1681 = vperm.xlu0 %1680, %v1655
    %v1682 = vpop.permute.xlu0 %1681
    %1685 = vset.pattern.permute.xlu0 0
    %1686 = vperm.xlu0 %1685, %v1656
    %v1687 = vpop.permute.xlu0 %1686
    %1690 = vset.pattern.permute.xlu0 0
    %1691 = vperm.xlu0 %1690, %v1657
    %v1692 = vpop.permute.xlu0 %1691
    %1695 = vset.pattern.permute.xlu0 0
    %1696 = vperm.xlu0 %1695, %v1658
    %v1697 = vpop.permute.xlu0 %1696
    %1700 = vset.pattern.permute.xlu0 0
    %1701 = vperm.xlu0 %1700, %v1659
    %v1702 = vpop.permute.xlu0 %1701
    %1705 = vset.pattern.permute.xlu0 0
    %1706 = vperm.xlu0 %1705, %v1660
    %v1707 = vpop.permute.xlu0 %1706
    %1710 = vset.pattern.permute.xlu0 0
    %1711 = vperm.xlu0 %1710, %v1661
    %v1712 = vpop.permute.xlu0 %1711
    %1715 = vset.pattern.permute.xlu0 0
    %1716 = vperm.xlu0 %1715, %v1662
    %v1717 = vpop.permute.xlu0 %1716
    %1720 = vset.pattern.permute.xlu0 0
    %1721 = vperm.xlu0 %1720, %v1663
    %v1722 = vpop.permute.xlu0 %1721
    %1725 = vset.pattern.permute.xlu0 0
    %1726 = vperm.xlu0 %1725, %v1664
    %v1727 = vpop.permute.xlu0 %1726
    %1730 = vset.pattern.permute.xlu0 0
    %1731 = vperm.xlu0 %1730, %v1665
    %v1732 = vpop.permute.xlu0 %1731
    %1735 = vset.pattern.permute.xlu0 0
    %1736 = vperm.xlu0 %1735, %v1666
    %v1737 = vpop.permute.xlu0 %1736
    %1740 = vset.pattern.permute.xlu0 0
    %1741 = vperm.xlu0 %1740, %v1667
    %v1742 = vpop.permute.xlu0 %1741
    %1745 = vset.pattern.permute.xlu0 0
    %1746 = vperm.xlu0 %1745, %v1668
    %v1747 = vpop.permute.xlu0 %1746
    %v1765 = vunpack.c.l.b16 %v1621
    %v1766 = vunpack.c.h.b16 %v1621
    %v1767 = vunpack.c.l.b16 %v1622
    %v1768 = vunpack.c.h.b16 %v1622
    %v1769 = vunpack.c.l.b16 %v1623
    %v1770 = vunpack.c.h.b16 %v1623
    %v1771 = vunpack.c.l.b16 %v1624
    %v1772 = vunpack.c.h.b16 %v1624
    %v1773 = vunpack.c.l.b16 %v1625
    %v1774 = vunpack.c.h.b16 %v1625
    %v1775 = vunpack.c.l.b16 %v1626
    %v1776 = vunpack.c.h.b16 %v1626
    %v1777 = vunpack.c.l.b16 %v1627
    %v1778 = vunpack.c.h.b16 %v1627
    %v1779 = vunpack.c.l.b16 %v1628
    %v1780 = vunpack.c.h.b16 %v1628
    %v1781 = vunpack.c.l.b16 %v1629
    %v1782 = vunpack.c.h.b16 %v1629
    %v1783 = vunpack.c.l.b16 %v1630
    %v1784 = vunpack.c.h.b16 %v1630
    %v1785 = vunpack.c.l.b16 %v1631
    %v1786 = vunpack.c.h.b16 %v1631
    %v1787 = vunpack.c.l.b16 %v1632
    %v1788 = vunpack.c.h.b16 %v1632
    %v1789 = vunpack.c.l.b16 %v1633
    %v1790 = vunpack.c.h.b16 %v1633
    %v1791 = vunpack.c.l.b16 %v1634
    %v1792 = vunpack.c.h.b16 %v1634
    %v1793 = vunpack.c.l.b16 %v1635
    %v1794 = vunpack.c.h.b16 %v1635
    %v1795 = vunpack.c.l.b16 %v1636
    %v1796 = vunpack.c.h.b16 %v1636
    %v1797 = vpack.c.b16 %v1767, %v1765
    %v1798 = vpack.c.b16 %v1768, %v1766
    %v1799 = vpack.c.b16 %v1771, %v1769
    %v1800 = vpack.c.b16 %v1772, %v1770
    %v1801 = vpack.c.b16 %v1775, %v1773
    %v1802 = vpack.c.b16 %v1776, %v1774
    %v1803 = vpack.c.b16 %v1779, %v1777
    %v1804 = vpack.c.b16 %v1780, %v1778
    %v1805 = vpack.c.b16 %v1783, %v1781
    %v1806 = vpack.c.b16 %v1784, %v1782
    %v1807 = vpack.c.b16 %v1787, %v1785
    %v1808 = vpack.c.b16 %v1788, %v1786
    %v1809 = vpack.c.b16 %v1791, %v1789
    %v1810 = vpack.c.b16 %v1792, %v1790
    %v1811 = vpack.c.b16 %v1795, %v1793
    %v1812 = vpack.c.b16 %v1796, %v1794
    %1829 = vmatpush.bf16.msra.mxu0 %v1644
    %1830 = vmatpush.bf16.msra.mxu0 %v1643
    %1831 = vmatpush.bf16.msra.mxu0 %v1642
    %1832 = vmatpush.bf16.msra.mxu0 %v1641
    %1833 = vmatpush.bf16.msra.mxu0 %v1640
    %1834 = vmatpush.bf16.msra.mxu0 %v1639
    %1835 = vmatpush.bf16.msra.mxu0 %v1638
    %1836 = vmatpush.bf16.msra.mxu0 %v1637
    %1837 = vmatmul.bf16.gmra.mxu0 %v1797
    %v1838 = vpop.f32.mrf.mxu0
    %v1839 = vadd.f32 %v1672, %v1838
    %v1840 = vpop.f32.mrf.mxu0
    %v1841 = vadd.f32 %v1677, %v1840
    %1842 = vmatmul.bf16.gmra.mxu0 %v1799
    %v1843 = vpop.f32.mrf.mxu0
    %v1844 = vadd.f32 %v1682, %v1843
    %v1845 = vpop.f32.mrf.mxu0
    %v1846 = vadd.f32 %v1687, %v1845
    %1847 = vmatmul.bf16.gmra.mxu0 %v1801
    %v1848 = vpop.f32.mrf.mxu0
    %v1849 = vadd.f32 %v1692, %v1848
    %v1850 = vpop.f32.mrf.mxu0
    %v1851 = vadd.f32 %v1697, %v1850
    %1852 = vmatmul.bf16.gmra.mxu0 %v1803
    %v1853 = vpop.f32.mrf.mxu0
    %v1854 = vadd.f32 %v1702, %v1853
    %v1855 = vpop.f32.mrf.mxu0
    %v1856 = vadd.f32 %v1707, %v1855
    %1857 = vmatmul.bf16.gmra.mxu0 %v1805
    %v1858 = vpop.f32.mrf.mxu0
    %v1859 = vadd.f32 %v1712, %v1858
    %v1860 = vpop.f32.mrf.mxu0
    %v1861 = vadd.f32 %v1717, %v1860
    %1862 = vmatmul.bf16.gmra.mxu0 %v1807
    %v1863 = vpop.f32.mrf.mxu0
    %v1864 = vadd.f32 %v1722, %v1863
    %v1865 = vpop.f32.mrf.mxu0
    %v1866 = vadd.f32 %v1727, %v1865
    %1867 = vmatmul.bf16.gmra.mxu0 %v1809
    %v1868 = vpop.f32.mrf.mxu0
    %v1869 = vadd.f32 %v1732, %v1868
    %v1870 = vpop.f32.mrf.mxu0
    %v1871 = vadd.f32 %v1737, %v1870
    %1872 = vmatmul.bf16.gmra.mxu0 %v1811
    %v1873 = vpop.f32.mrf.mxu0
    %v1874 = vadd.f32 %v1742, %v1873
    %v1875 = vpop.f32.mrf.mxu0
    %v1876 = vadd.f32 %v1747, %v1875
    %1877 = vdwg.mxu0
    %1878 = vmatpush.bf16.msra.mxu0 %v1652
    %1879 = vmatpush.bf16.msra.mxu0 %v1651
    %1880 = vmatpush.bf16.msra.mxu0 %v1650
    %1881 = vmatpush.bf16.msra.mxu0 %v1649
    %1882 = vmatpush.bf16.msra.mxu0 %v1648
    %1883 = vmatpush.bf16.msra.mxu0 %v1647
    %1884 = vmatpush.bf16.msra.mxu0 %v1646
    %1885 = vmatpush.bf16.msra.mxu0 %v1645
    %1886 = vmatmul.bf16.gmra.mxu0 %v1798
    %v1887 = vpop.f32.mrf.mxu0
    %v1888 = vadd.f32 %v1839, %v1887
    %v1889 = vpop.f32.mrf.mxu0
    %v1890 = vadd.f32 %v1841, %v1889
    %1891 = vmatmul.bf16.gmra.mxu0 %v1800
    %v1892 = vpop.f32.mrf.mxu0
    %v1893 = vadd.f32 %v1844, %v1892
    %v1894 = vpop.f32.mrf.mxu0
    %v1895 = vadd.f32 %v1846, %v1894
    %1896 = vmatmul.bf16.gmra.mxu0 %v1802
    %v1897 = vpop.f32.mrf.mxu0
    %v1898 = vadd.f32 %v1849, %v1897
    %v1899 = vpop.f32.mrf.mxu0
    %v1900 = vadd.f32 %v1851, %v1899
    %1901 = vmatmul.bf16.gmra.mxu0 %v1804
    %v1902 = vpop.f32.mrf.mxu0
    %v1903 = vadd.f32 %v1854, %v1902
    %v1904 = vpop.f32.mrf.mxu0
    %v1905 = vadd.f32 %v1856, %v1904
    %1906 = vmatmul.bf16.gmra.mxu0 %v1806
    %v1907 = vpop.f32.mrf.mxu0
    %v1908 = vadd.f32 %v1859, %v1907
    %v1909 = vpop.f32.mrf.mxu0
    %v1910 = vadd.f32 %v1861, %v1909
    %1911 = vmatmul.bf16.gmra.mxu0 %v1808
    %v1912 = vpop.f32.mrf.mxu0
    %v1913 = vadd.f32 %v1864, %v1912
    %v1914 = vpop.f32.mrf.mxu0
    %v1915 = vadd.f32 %v1866, %v1914
    %1916 = vmatmul.bf16.gmra.mxu0 %v1810
    %v1917 = vpop.f32.mrf.mxu0
    %v1918 = vadd.f32 %v1869, %v1917
    %v1919 = vpop.f32.mrf.mxu0
    %v1920 = vadd.f32 %v1871, %v1919
    %1921 = vmatmul.bf16.gmra.mxu0 %v1812
    %v1922 = vpop.f32.mrf.mxu0
    %v1923 = vadd.f32 %v1874, %v1922
    %v1924 = vpop.f32.mrf.mxu0
    %v1925 = vadd.f32 %v1876, %v1924
    %1926 = vdwg.mxu0
    %v1927 = vmax.f32 %v1888, 0.0
    %v1928 = vmax.f32 %v1890, 0.0
    %v1929 = vmax.f32 %v1893, 0.0
    %v1930 = vmax.f32 %v1895, 0.0
    %v1931 = vmax.f32 %v1898, 0.0
    %v1932 = vmax.f32 %v1900, 0.0
    %v1933 = vmax.f32 %v1903, 0.0
    %v1934 = vmax.f32 %v1905, 0.0
    %v1935 = vmax.f32 %v1908, 0.0
    %v1936 = vmax.f32 %v1910, 0.0
    %v1937 = vmax.f32 %v1913, 0.0
    %v1938 = vmax.f32 %v1915, 0.0
    %v1939 = vmax.f32 %v1918, 0.0
    %v1940 = vmax.f32 %v1920, 0.0
    %v1941 = vmax.f32 %v1923, 0.0
    %v1942 = vmax.f32 %v1925, 0.0
    %v1943 = vld [vmem:[%s7] sm:$0xf]
    %v1944 = vld [vmem:[%s7 + $0x4] sm:$0xf]
    %v1945 = vld [vmem:[%s7 + $0x8] sm:$0xf]
    %v1946 = vld [vmem:[%s7 + $0xc] sm:$0xf]
    %v1947 = vpack.c.bf16 %v1928, %v1927
    %v1948 = vpack.c.bf16 %v1930, %v1929
    %v1949 = vpack.c.bf16 %v1932, %v1931
    %v1950 = vpack.c.bf16 %v1934, %v1933
    %v1951 = vpack.c.bf16 %v1936, %v1935
    %v1952 = vpack.c.bf16 %v1938, %v1937
    %v1953 = vpack.c.bf16 %v1940, %v1939
    %v1954 = vpack.c.bf16 %v1942, %v1941
    %v1955 = vld [vmem:[%s12 + $0x180] sm:$0xff]
    %v1956 = vld [vmem:[%s12 + $0x188] sm:$0xff]
    %v1957 = vld [vmem:[%s12 + $0x190] sm:$0xff]
    %v1958 = vld [vmem:[%s12 + $0x198] sm:$0xff]
    %1960 = vset.pattern.permute.xlu0 0
    %1961 = vperm.xlu0 %1960, %v1955
    %v1962 = vpop.permute.xlu0 %1961
    %1965 = vset.pattern.permute.xlu0 0
    %1966 = vperm.xlu0 %1965, %v1956
    %v1967 = vpop.permute.xlu0 %1966
    %1970 = vset.pattern.permute.xlu0 0
    %1971 = vperm.xlu0 %1970, %v1957
    %v1972 = vpop.permute.xlu0 %1971
    %1975 = vset.pattern.permute.xlu0 0
    %1976 = vperm.xlu0 %1975, %v1958
    %v1977 = vpop.permute.xlu0 %1976
    %v1983 = vunpack.c.l.b16 %v1943
    %v1984 = vunpack.c.l.b16 %v1944
    %v1985 = vunpack.c.l.b16 %v1945
    %v1986 = vunpack.c.l.b16 %v1946
    %v1987 = vpack.c.b16 %v1984, %v1983
    %v1988 = vpack.c.b16 %v1986, %v1985
    %1991 = vmatpush.bf16.msra.mxu0 %v1954
    %1992 = vmatpush.bf16.msra.mxu0 %v1953
    %1993 = vmatpush.bf16.msra.mxu0 %v1952
    %1994 = vmatpush.bf16.msra.mxu0 %v1951
    %1995 = vmatpush.bf16.msra.mxu0 %v1950
    %1996 = vmatpush.bf16.msra.mxu0 %v1949
    %1997 = vmatpush.bf16.msra.mxu0 %v1948
    %1998 = vmatpush.bf16.msra.mxu0 %v1947
    %1999 = vmatmul.bf16.gmra.mxu0 %v1987
    %v2000 = vpop.f32.mrf.mxu0
    %v2001 = vadd.f32 %v1962, %v2000
    %v2002 = vpop.f32.mrf.mxu0
    %v2003 = vadd.f32 %v1967, %v2002
    %2004 = vmatmul.bf16.gmra.mxu0 %v1988
    %v2005 = vpop.f32.mrf.mxu0
    %v2006 = vadd.f32 %v1972, %v2005
    %v2007 = vpop.f32.mrf.mxu0
    %v2008 = vadd.f32 %v1977, %v2007
    %2009 = vdwg.mxu0
    %v2010 = vmax.f32 %v2001, 0.0
    %v2011 = vmax.f32 %v2003, 0.0
    %v2012 = vmax.f32 %v2006, 0.0
    %v2013 = vmax.f32 %v2008, 0.0
    %v2014 = vld [vmem:[%s8] sm:$0xf]
    %v2015 = vpack.c.bf16 %v2011, %v2010
    %v2016 = vpack.c.bf16 %v2013, %v2012
    %v2017 = vld [vmem:[%s12 + $0x1a0] sm:$0xff]
    %2019 = vset.pattern.permute.xlu0 0
    %2020 = vperm.xlu0 %2019, %v2017
    %v2021 = vpop.permute.xlu0 %2020
    %vm2023 = vcmask 261120
    %v2025 = vsel %vm2023, %v2014, 0
    %2027 = vmatpush.bf16.msra.mxu0 0
    %2028 = vmatpush.bf16.msra.mxu0 0
    %2029 = vmatpush.bf16.msra.mxu0 0
    %2030 = vmatpush.bf16.msra.mxu0 0
    %2031 = vmatpush.bf16.msra.mxu0 0
    %2032 = vmatpush.bf16.msra.mxu0 0
    %2033 = vmatpush.bf16.msra.mxu0 %v2016
    %2034 = vmatpush.bf16.msra.mxu0 %v2015
    %2035 = vmatmul.bf16.gmra.mxu0 %v2025
    %v2036 = vpop.f32.mrf.mxu0
    %v2037 = vadd.f32 %v2021, %v2036
    %v2038 = vpop.f32.mrf.mxu0
    %2039 = vdwg.mxu0
    %v2040 = vmax.f32 %v2037, 0.0
    %v2041 = vld [vmem:[%s9] sm:$0xf]
    %v2042 = vld [vmem:[%s9 + $0x4] sm:$0xf]
    %v2043 = vld [vmem:[%s9 + $0x8] sm:$0xf]
    %v2044 = vld [vmem:[%s9 + $0xc] sm:$0xf]
    %v2045 = vpack.c.bf16 %v2040, %v2040
    %v2046 = vld [vmem:[%s12 + $0x1a8] sm:$0xff]
    %v2047 = vld [vmem:[%s12 + $0x1b0] sm:$0xff]
    %v2048 = vld [vmem:[%s12 + $0x1b8] sm:$0xff]
    %v2049 = vld [vmem:[%s12 + $0x1c0] sm:$0xff]
    %2051 = vset.pattern.permute.xlu0 0
    %2052 = vperm.xlu0 %2051, %v2046
    %v2053 = vpop.permute.xlu0 %2052
    %2056 = vset.pattern.permute.xlu0 0
    %2057 = vperm.xlu0 %2056, %v2047
    %v2058 = vpop.permute.xlu0 %2057
    %2061 = vset.pattern.permute.xlu0 0
    %2062 = vperm.xlu0 %2061, %v2048
    %v2063 = vpop.permute.xlu0 %2062
    %2066 = vset.pattern.permute.xlu0 0
    %2067 = vperm.xlu0 %2066, %v2049
    %v2068 = vpop.permute.xlu0 %2067
    %v2074 = vunpack.c.l.b16 %v2041
    %v2075 = vunpack.c.l.b16 %v2042
    %v2076 = vunpack.c.l.b16 %v2043
    %v2077 = vunpack.c.l.b16 %v2044
    %v2078 = vpack.c.b16 %v2075, %v2074
    %v2079 = vpack.c.b16 %v2077, %v2076
    %vm2080 = vcmask 64512
    %v2082 = vsel %vm2080, %v2078, 0
    %v2085 = vsel %vm2080, %v2079, 0
    %vm2087 = vcmask 1043456
    %v2089 = vsel %vm2087, %v2045, 0
    %2091 = vmatpush.bf16.msra.mxu0 0
    %2092 = vmatpush.bf16.msra.mxu0 0
    %2093 = vmatpush.bf16.msra.mxu0 0
    %2094 = vmatpush.bf16.msra.mxu0 0
    %2095 = vmatpush.bf16.msra.mxu0 0
    %2096 = vmatpush.bf16.msra.mxu0 0
    %2097 = vmatpush.bf16.msra.mxu0 0
    %2098 = vmatpush.bf16.msra.mxu0 %v2089
    %2099 = vmatmul.bf16.gmra.mxu0 %v2082
    %v2100 = vpop.f32.mrf.mxu0
    %v2101 = vadd.f32 %v2053, %v2100
    %v2102 = vpop.f32.mrf.mxu0
    %v2103 = vadd.f32 %v2058, %v2102
    %2104 = vmatmul.bf16.gmra.mxu0 %v2085
    %v2105 = vpop.f32.mrf.mxu0
    %v2106 = vadd.f32 %v2063, %v2105
    %v2107 = vpop.f32.mrf.mxu0
    %v2108 = vadd.f32 %v2068, %v2107
    %2109 = vdwg.mxu0
    %v2110 = vmax.f32 %v2101, 0.0
    %v2111 = vmax.f32 %v2103, 0.0
    %v2112 = vmax.f32 %v2106, 0.0
    %v2113 = vmax.f32 %v2108, 0.0
    %v2114 = vld [vmem:[%s10] sm:$0xf]
    %v2115 = vld [vmem:[%s10 + $0x4] sm:$0xf]
    %v2116 = vld [vmem:[%s10 + $0x8] sm:$0xf]
    %v2117 = vld [vmem:[%s10 + $0xc] sm:$0xf]
    %v2118 = vpack.c.bf16 %v2111, %v2110
    %v2119 = vpack.c.bf16 %v2113, %v2112
    %v2120 = vld [vmem:[%s12 + $0x1c8] sm:$0xff]
    %v2121 = vld [vmem:[%s12 + $0x1d0] sm:$0xff]
    %v2122 = vld [vmem:[%s12 + $0x1d8] sm:$0xff]
    %v2123 = vld [vmem:[%s12 + $0x1e0] sm:$0xff]
    %2125 = vset.pattern.permute.xlu0 0
    %2126 = vperm.xlu0 %2125, %v2120
    %v2127 = vpop.permute.xlu0 %2126
    %2130 = vset.pattern.permute.xlu0 0
    %2131 = vperm.xlu0 %2130, %v2121
    %v2132 = vpop.permute.xlu0 %2131
    %2135 = vset.pattern.permute.xlu0 0
    %2136 = vperm.xlu0 %2135, %v2122
    %v2137 = vpop.permute.xlu0 %2136
    %2140 = vset.pattern.permute.xlu0 0
    %2141 = vperm.xlu0 %2140, %v2123
    %v2142 = vpop.permute.xlu0 %2141
    %v2148 = vunpack.c.l.b16 %v2114
    %v2149 = vunpack.c.l.b16 %v2115
    %v2150 = vunpack.c.l.b16 %v2116
    %v2151 = vunpack.c.l.b16 %v2117
    %v2152 = vpack.c.b16 %v2149, %v2148
    %v2153 = vpack.c.b16 %v2151, %v2150
    %v2155 = vsel %vm2023, %v2152, 0
    %v2158 = vsel %vm2023, %v2153, 0
    %2160 = vmatpush.bf16.msra.mxu0 0
    %2161 = vmatpush.bf16.msra.mxu0 0
    %2162 = vmatpush.bf16.msra.mxu0 0
    %2163 = vmatpush.bf16.msra.mxu0 0
    %2164 = vmatpush.bf16.msra.mxu0 0
    %2165 = vmatpush.bf16.msra.mxu0 0
    %2166 = vmatpush.bf16.msra.mxu0 %v2119
    %2167 = vmatpush.bf16.msra.mxu0 %v2118
    %2168 = vmatmul.bf16.gmra.mxu0 %v2155
    %v2169 = vpop.f32.mrf.mxu0
    %v2170 = vadd.f32 %v2127, %v2169
    %v2171 = vpop.f32.mrf.mxu0
    %v2172 = vadd.f32 %v2132, %v2171
    %2173 = vmatmul.bf16.gmra.mxu0 %v2158
    %v2174 = vpop.f32.mrf.mxu0
    %v2175 = vadd.f32 %v2137, %v2174
    %v2176 = vpop.f32.mrf.mxu0
    %v2177 = vadd.f32 %v2142, %v2176
    %2178 = vdwg.mxu0
    %v2179 = vmax.f32 %v2170, 0.0
    %v2180 = vmax.f32 %v2172, 0.0
    %v2181 = vmax.f32 %v2175, 0.0
    %v2182 = vmax.f32 %v2177, 0.0
    %v2183 = vld [vmem:[%s11] sm:$0xf]
    %v2184 = vld [vmem:[%s11 + $0x4] sm:$0xf]
    %v2185 = vpack.c.bf16 %v2180, %v2179
    %v2186 = vpack.c.bf16 %v2182, %v2181
    %v2187 = vld [vmem:[%s12 + $0x1e8] sm:$0xff]
    %v2188 = vld [vmem:[%s12 + $0x1f0] sm:$0xff]
    %2190 = vset.pattern.permute.xlu0 0
    %2191 = vperm.xlu0 %2190, %v2187
    %v2192 = vpop.permute.xlu0 %2191
    %2195 = vset.pattern.permute.xlu0 0
    %2196 = vperm.xlu0 %2195, %v2188
    %v2197 = vpop.permute.xlu0 %2196
    %v2201 = vunpack.c.l.b16 %v2183
    %v2202 = vunpack.c.l.b16 %v2184
    %v2203 = vpack.c.b16 %v2202, %v2201
    %v2205 = vsel %vm2023, %v2203, 0
    %2207 = vmatpush.bf16.msra.mxu0 0
    %2208 = vmatpush.bf16.msra.mxu0 0
    %2209 = vmatpush.bf16.msra.mxu0 0
    %2210 = vmatpush.bf16.msra.mxu0 0
    %2211 = vmatpush.bf16.msra.mxu0 0
    %2212 = vmatpush.bf16.msra.mxu0 0
    %2213 = vmatpush.bf16.msra.mxu0 %v2186
    %2214 = vmatpush.bf16.msra.mxu0 %v2185
    %2215 = vmatmul.bf16.gmra.mxu0 %v2205
    %v2216 = vpop.f32.mrf.mxu0
    %v2217 = vadd.f32 %v2192, %v2216
    %v2218 = vpop.f32.mrf.mxu0
    %v2219 = vadd.f32 %v2197, %v2218
    %2220 = vdwg.mxu0
    %2221 = vst [vmem:[%s13] sm:$0xff] %v2217
    %2222 = vst [vmem:[%s13 + $0x8] sm:$0xff] %v2219
    // Predicated region
    $region70: #{_lambda_.1} parent=1 // pred_check
      _
    $region71: #{_lambda_.1} parent=1 // pred_check_branch
      %2224 = sbr.rel (0) target = $region73
    $region72: #{_lambda_.1} parent=1 // pred_region
      _
    $region73: #{_lambda_.1} parent=1 // pred_fallthru
      _
    // Predicated region
    $region74: #{_lambda_.1} parent=1 // pred_check
      _
    $region75: #{_lambda_.1} parent=1 // pred_check_branch
      %2226 = sbr.rel (0) target = $region77
    $region76: #{_lambda_.1} parent=1 // pred_region
      _
    $region77: #{_lambda_.1} parent=1 // pred_fallthru
      _
    %2227 = vsyncpa [#allocation3], 1
    %2228 = vsyncpa [#allocation5], 1
    %2229 = vsyncpa [#allocation8], 1

</llo_original>
